<compile_context>
chip_gen: v7x
topology: tpu7x:2x2x1
jax: 0.10.0
libtpu: 0.0.40
codegen_flags: <defaults>
</compile_context>

<pallas_src>
import math

import jax
import jax.numpy as jnp
from jax.experimental import pallas as pl
from jax.experimental.pallas import tpu as pltpu


# --------------------------------------------------------------------------- #
# Kernel
# --------------------------------------------------------------------------- #
def _make_kernel(with_mask, with_probs):
    def body(scale_ref, q_ref, k_ref, v_ref, m_ref, o_ref, p_ref):
        inv_scale = 1.0 / scale_ref[0]          # learnable scalar, lives in SMEM

        # Fold 1/scaling into Q: O(tq*D) pass instead of scaling (tq, Sk) scores.
        q = q_ref[...] * inv_scale.astype(q_ref.dtype)   # (TG, tq, D)
        k = k_ref[...]                                    # (TG, Sk, D)
        v = v_ref[...]                                    # (TG, Sk, D)

        # scores = (Q/scaling) K^T : one batched MXU contraction over TG groups.
        s = jnp.einsum("gqd,gkd->gqk", q, k,
                       preferred_element_type=jnp.float32)
        if m_ref is not None:
            # int8 mask block; (1, tq, Sk) shared blocks broadcast over groups.
            s = jnp.where(m_ref[...] != 0, s, jnp.float32(-1e9))

        # numerically-stable softmax along the key axis
        s = s - jnp.max(s, axis=-1, keepdims=True)
        e = jnp.exp(s)
        denom = jnp.sum(e, axis=-1, keepdims=True)
        # approx reciprocal -> EUP slot (denom >= 1 after max-subtraction).
        p = e * pl.reciprocal(denom, approx=True)
        # TODO(synk): nn.Dropout(p) on probs is train-mode only; eval semantics here.

        if p_ref is not None:
            p_ref[...] = p.astype(p_ref.dtype)
        o = jnp.einsum("gqk,gkd->gqd", p.astype(v.dtype), v,
                       preferred_element_type=jnp.float32)
        o_ref[...] = o.astype(o_ref.dtype)

    if with_mask and with_probs:
        def kernel(s, q, k, v, m, o, p):
            body(s, q, k, v, m, o, p)
    elif with_mask:
        def kernel(s, q, k, v, m, o):
            body(s, q, k, v, m, o, None)
    elif with_probs:
        def kernel(s, q, k, v, o, p):
            body(s, q, k, v, None, o, p)
    else:
        def kernel(s, q, k, v, o):
            body(s, q, k, v, None, o, None)
    return kernel


# --------------------------------------------------------------------------- #
# VMEM budget / tile selection
# --------------------------------------------------------------------------- #
def _vmem_limit_bytes():
    """Generation-aware scoped-VMEM limit: ~half of physical VMEM, capped at
    64 MiB.  v5e/v6e (128 MiB physical) -> 64 MiB; v7x (64 MiB/TC) -> 32 MiB."""
    try:
        cap = int(pltpu.get_tpu_info().vmem_capacity_bytes)
    except Exception:
        cap = 64 << 20   # conservative fallback == v7x per-TC VMEM
    return max(16 << 20, min(cap // 2, 64 << 20))


def _pick_tiles(G, sq, sk, d, qkv_item, out_item, probs_item, mask_item,
                mask_shared, vmem_budget):
    """Pick (group_tile, q_tile): largest per-step work that fits the VMEM
    budget (double-buffered blocks + f32 s/e/p intermediates) while keeping
    >= 2 total grid steps (v7x dual TensorCore) whenever that is achievable."""
    # query-tile candidates: second-minor dim of Q/O/probs blocks -> multiple of 8
    if sq % 8 == 0:
        tq_cands = [t for t in range(8, min(sq, 512) + 1, 8) if sq % t == 0]
        if mask_item:
            c32 = [t for t in tq_cands if t % 32 == 0]   # int8 mask sublane packing
            tq_cands = c32 or tq_cands
    else:
        tq_cands = [sq]
    tg_cands = [t for t in range(1, G + 1) if G % t == 0]

    def step_bytes(tg, tq):
        b = 2 * tg * tq * d * qkv_item                    # Q (double-buffered)
        b += 2 * 2 * tg * sk * d * qkv_item               # K + V
        b += 2 * tg * tq * d * out_item                   # O
        if probs_item:
            b += 2 * tg * tq * sk * probs_item            # probs writeback
        if mask_item:
            b += 2 * (1 if mask_shared else tg) * tq * sk * mask_item
        b += 3 * tg * tq * sk * 4                         # f32 s / e / p
        b += tg * tq * d * 4                              # f32 output accumulator
        return b

    min_tq = min(tq_cands)
    can_split = G * (sq // min_tq) >= 2

    best = None
    for tq in tq_cands:
        for tg in tg_cands:
            steps = (G // tg) * (sq // tq)
            if can_split and steps < 2:
                continue
            if step_bytes(tg, tq) > vmem_budget:
                continue
            key = (tg * tq, tq)
            if best is None or key > best[0]:
                best = (key, tg, tq)
    if best is None:
        return 1, min_tq
    return best[1], best[2]


# --------------------------------------------------------------------------- #
# Wrapper
# --------------------------------------------------------------------------- #
def learnable_scaling_attention(q, k, v, scaling, mask=None, *,
                                group_tile=None, q_tile=None,
                                return_probs=True):
    """Pallas forward of LearnableScalingAttention.

    q: (..., Sq, D), k/v: (..., Sk, D), scaling: learnable scalar,
    mask: optional, broadcastable to (..., Sq, Sk); nonzero == keep.
    Returns (out, probs) — or just out if return_probs=False.
    Note: probs are emitted in q.dtype (bf16 inputs -> bf16 probs).
    """
    *lead, sq, d = q.shape
    sk = k.shape[-2]
    lead = tuple(lead)
    G = int(math.prod(lead)) if lead else 1

    q3 = q.reshape(G, sq, d)
    k3 = k.reshape(G, sk, d)
    v3 = v.reshape(G, sk, d)
    scale_arr = jnp.asarray(scaling, dtype=jnp.float32).reshape(1)

    with_mask = mask is not None
    mask_shared = False
    if with_mask:
        m = jnp.asarray(mask)
        if m.ndim >= 2 and all(s == 1 for s in m.shape[:-2]):
            # one (Sq, Sk) block shared by every (batch, head) group
            mask_shared = True
            m3 = jnp.broadcast_to(m.reshape(m.shape[-2:]), (sq, sk)).reshape(1, sq, sk)
        else:
            m3 = jnp.broadcast_to(m, lead + (sq, sk)).reshape(G, sq, sk)
        m3 = (m3 != 0).astype(jnp.int8)   # int8 stream: 4x less DMA than f32

    vmem_limit = _vmem_limit_bytes()
    probs_item = q.dtype.itemsize if return_probs else 0
    tg, tq = _pick_tiles(G, sq, sk, d,
                         q.dtype.itemsize, q.dtype.itemsize,
                         probs_item, 1 if with_mask else 0,
                         mask_shared, int(vmem_limit * 0.9))
    if group_tile is not None:
        tg = group_tile
    if q_tile is not None:
        tq = q_tile
    assert G % tg == 0 and sq % tq == 0

    # qi innermost: K/V block index constant across it -> their DMA is elided.
    grid = (G // tg, sq // tq)

    in_specs = [
        pl.BlockSpec(memory_space=pltpu.MemorySpace.SMEM),            # scaling
        pl.BlockSpec((tg, tq, d), lambda g, qi: (g, qi, 0)),          # Q
        pl.BlockSpec((tg, sk, d), lambda g, qi: (g, 0, 0)),           # K
        pl.BlockSpec((tg, sk, d), lambda g, qi: (g, 0, 0)),           # V
    ]
    args = [scale_arr, q3, k3, v3]
    if with_mask:
        if mask_shared:
            in_specs.append(pl.BlockSpec((1, tq, sk), lambda g, qi: (0, qi, 0)))
        else:
            in_specs.append(pl.BlockSpec((tg, tq, sk), lambda g, qi: (g, qi, 0)))
        args.append(m3)

    o_shape = jax.ShapeDtypeStruct((G, sq, d), q.dtype)
    o_spec = pl.BlockSpec((tg, tq, d), lambda g, qi: (g, qi, 0))
    if return_probs:
        out_shape = (o_shape, jax.ShapeDtypeStruct((G, sq, sk), q.dtype))
        out_specs = (o_spec, pl.BlockSpec((tg, tq, sk), lambda g, qi: (g, qi, 0)))
    else:
        out_shape = o_shape
        out_specs = o_spec

    res = pl.pallas_call(
        _make_kernel(with_mask, return_probs),
        out_shape=out_shape,
        grid=grid,
        in_specs=in_specs,
        out_specs=out_specs,
        compiler_params=pltpu.CompilerParams(
            # both axes fully independent (full Sk per step -> no reduction axis)
            dimension_semantics=("parallel", "parallel"),
            vmem_limit_bytes=vmem_limit),
        # NOTE: pipeline_mode=pl.Buffered(3) on the Q/mask/probs specs is a
        # cheap knob to sweep if per-step DMA ever shows up exposed.
    )(*args)

    if return_probs:
        out, probs = res
        return out.reshape(lead + (sq, d)), probs.reshape(lead + (sq, sk))
    return res.reshape(lead + (sq, d))


def learnable_scaling_attention_ref(q, k, v, scaling, mask=None):
    """Pure-JAX mirror of the PyTorch forward (eval mode) for validation."""
    qf, kf, vf = (t.astype(jnp.float32) for t in (q, k, v))
    scores = jnp.einsum("...qd,...kd->...qk", qf, kf) / scaling
    if mask is not None:
        scores = jnp.where(mask == 0, -1e9, scores)
    probs = jax.nn.softmax(scores, axis=-1)
    out = jnp.einsum("...qk,...kd->...qd", probs, vf)
    return out, probs


if __name__ == "__main__":
    # Small but lane-dense shapes: key_size = 128, seq = 128, 2x4 = 8 (B, H) groups.
    B, H, Sq, Sk, D = 2, 4, 128, 128, 128

    key = jax.random.PRNGKey(0)
    kq, kk, kv = jax.random.split(key, 3)
    q = jax.random.normal(kq, (B, H, Sq, D), dtype=jnp.float32)
    k = jax.random.normal(kk, (B, H, Sk, D), dtype=jnp.float32)
    v = jax.random.normal(kv, (B, H, Sk, D), dtype=jnp.float32)
    scaling = jnp.float32(math.sqrt(D))      # nn.Parameter init: sqrt(key_size)

    def check(name, got, want, rtol, atol):
        got32 = got.astype(jnp.float32)
        err = jnp.max(jnp.abs(got32 - want))
        assert jnp.allclose(got32, want, rtol=rtol, atol=atol), (
            f"{name} max abs err = {err}")

    # ---- unmasked, f32 ----
    out, probs = learnable_scaling_attention(q, k, v, scaling)
    jax.block_until_ready((out, probs))
    out_r, probs_r = learnable_scaling_attention_ref(q, k, v, scaling)
    assert out.shape == (B, H, Sq, D) and probs.shape == (B, H, Sq, Sk)
    check("out", out, out_r, 2e-3, 2e-3)
    check("probs", probs, probs_r, 2e-3, 2e-3)

    # ---- per-(batch, head) causal mask, f32 (int8 per-group mask stream) ----
    causal = (jnp.arange(Sq)[:, None] >= jnp.arange(Sk)[None, :]).astype(jnp.float32)
    mask4 = jnp.broadcast_to(causal, (B, H, Sq, Sk))
    out_m, probs_m = learnable_scaling_attention(q, k, v, scaling, mask=mask4)
    jax.block_until_ready((out_m, probs_m))
    out_mr, probs_mr = learnable_scaling_attention_ref(q, k, v, scaling, mask=mask4)
    check("masked out", out_m, out_mr, 2e-3, 2e-3)
    check("masked probs", probs_m, probs_mr, 2e-3, 2e-3)

    # ---- shared 2-D causal mask: one (Sq, Sk) int8 block reused by all groups ----
    out_s, probs_s = learnable_scaling_attention(q, k, v, scaling, mask=causal)
    jax.block_until_ready((out_s, probs_s))
    check("shared-mask out", out_s, out_mr, 2e-3, 2e-3)
    check("shared-mask probs", probs_s, probs_mr, 2e-3, 2e-3)

    # ---- bf16 operands, probs writeback skipped (inference path) ----
    qb, kb, vb = (t.astype(jnp.bfloat16) for t in (q, k, v))
    out_b = learnable_scaling_attention(qb, kb, vb, scaling, return_probs=False)
    jax.block_until_ready(out_b)
    out_br, _ = learnable_scaling_attention_ref(qb, kb, vb, scaling)
    assert out_b.shape == (B, H, Sq, D)
    check("bf16 out (no probs)", out_b, out_br, 2e-2, 2e-2)

    print("KERNEL_OK")
</pallas_src>

<mosaic_0001>
module attributes {stable_mosaic.version = 11 : i64} {
  func.func @kernel(%arg0: i32, %arg1: i32, %arg2: memref<1xf32, #tpu.memory_space<smem>>, %arg3: memref<4x128x128xf32, #tpu.memory_space<vmem>>, %arg4: memref<4x128x128xf32, #tpu.memory_space<vmem>>, %arg5: memref<4x128x128xf32, #tpu.memory_space<vmem>>, %arg6: memref<4x128x128xf32, #tpu.memory_space<vmem>>, %arg7: memref<4x128x128xf32, #tpu.memory_space<vmem>>) attributes {dimension_semantics = [#tpu.dimension_semantics<parallel>, #tpu.dimension_semantics<parallel>], iteration_bounds = array<i64: 2, 1>, scalar_prefetch = 0 : i64, scratch_operands = 0 : i64, tpu.core_type = #tpu.core_type<tc>, window_params = [{transform_indices = @transform_0, window_bounds = array<i64: 1>}, {transform_indices = @transform_1, window_bounds = array<i64: 4, 128, 128>}, {transform_indices = @transform_2, window_bounds = array<i64: 4, 128, 128>}, {transform_indices = @transform_3, window_bounds = array<i64: 4, 128, 128>}, {transform_indices = @transform_4, window_bounds = array<i64: 4, 128, 128>}, {transform_indices = @transform_5, window_bounds = array<i64: 4, 128, 128>}]} {
    %c0 = arith.constant 0 : index
    %0 = memref.load %arg2[%c0] : memref<1xf32, #tpu.memory_space<smem>>
    %cst = arith.constant 1.000000e+00 : f32
    %1 = arith.divf %cst, %0 : f32
    %c0_0 = arith.constant 0 : index
    %c0_1 = arith.constant 0 : index
    %c0_2 = arith.constant 0 : index
    %2 = vector.load %arg3[%c0_0, %c0_1, %c0_2] : memref<4x128x128xf32, #tpu.memory_space<vmem>>, vector<4x128x128xf32>
    %3 = vector.broadcast %1 : f32 to vector<4x128x128xf32>
    %4 = arith.mulf %2, %3 : vector<4x128x128xf32>
    %c0_3 = arith.constant 0 : index
    %c0_4 = arith.constant 0 : index
    %c0_5 = arith.constant 0 : index
    %5 = vector.load %arg4[%c0_3, %c0_4, %c0_5] : memref<4x128x128xf32, #tpu.memory_space<vmem>>, vector<4x128x128xf32>
    %c0_6 = arith.constant 0 : index
    %c0_7 = arith.constant 0 : index
    %c0_8 = arith.constant 0 : index
    %6 = vector.load %arg5[%c0_6, %c0_7, %c0_8] : memref<4x128x128xf32, #tpu.memory_space<vmem>>, vector<4x128x128xf32>
    "tpu.trace_start"() <{level = 10 : i32, message = "gqd,gkd->gqk"}> : () -> ()
    %cst_9 = arith.constant dense<0.000000e+00> : vector<4x128x128xf32>
    %7 = tpu.matmul %4, %5, %cst_9 {dimension_numbers = #tpu.dot_dimension_numbers<[2], [2], [1], [1], [0, 0, 0, 1, 1, 1], [0], [0]>} : vector<4x128x128xf32>, vector<4x128x128xf32>, vector<4x128x128xf32> -> vector<4x128x128xf32>
    "tpu.trace_stop"() : () -> ()
    %cst_10 = arith.constant dense<0xFF800000> : vector<4x128xf32>
    %8 = vector.multi_reduction <maximumf>, %7, %cst_10 [2] : vector<4x128x128xf32> to vector<4x128xf32>
    %9 = vector.shape_cast %8 : vector<4x128xf32> to vector<4x128x1xf32>
    %10 = vector.broadcast %9 : vector<4x128x1xf32> to vector<4x128x128xf32>
    %11 = arith.subf %7, %10 : vector<4x128x128xf32>
    %12 = math.exp %11 : vector<4x128x128xf32>
    %cst_11 = arith.constant dense<0.000000e+00> : vector<4x128xf32>
    %13 = vector.multi_reduction <add>, %12, %cst_11 [2] : vector<4x128x128xf32> to vector<4x128xf32>
    %14 = vector.shape_cast %13 : vector<4x128xf32> to vector<4x128x1xf32>
    %15 = tpu.reciprocal %14 {approx = true} : vector<4x128x1xf32> -> vector<4x128x1xf32>
    %16 = vector.broadcast %15 : vector<4x128x1xf32> to vector<4x128x128xf32>
    %17 = arith.mulf %12, %16 : vector<4x128x128xf32>
    %c0_12 = arith.constant 0 : index
    %c0_13 = arith.constant 0 : index
    %c0_14 = arith.constant 0 : index
    %18 = vector.load %arg7[%c0_12, %c0_13, %c0_14] : memref<4x128x128xf32, #tpu.memory_space<vmem>>, vector<4x128x128xf32>
    tpu.vector_store %arg7[%c0_12, %c0_13, %c0_14], %17 {strides = array<i32>} : memref<4x128x128xf32, #tpu.memory_space<vmem>>, vector<4x128x128xf32>,
    "tpu.trace_start"() <{level = 10 : i32, message = "gqk,gkd->gqd"}> : () -> ()
    %cst_15 = arith.constant dense<0.000000e+00> : vector<4x128x128xf32>
    %19 = tpu.matmul %17, %6, %cst_15 {dimension_numbers = #tpu.dot_dimension_numbers<[2], [1], [1], [2], [0, 0, 0, 1, 1, 2], [0], [0]>} : vector<4x128x128xf32>, vector<4x128x128xf32>, vector<4x128x128xf32> -> vector<4x128x128xf32>
    "tpu.trace_stop"() : () -> ()
    %c0_16 = arith.constant 0 : index
    %c0_17 = arith.constant 0 : index
    %c0_18 = arith.constant 0 : index
    %20 = vector.load %arg6[%c0_16, %c0_17, %c0_18] : memref<4x128x128xf32, #tpu.memory_space<vmem>>, vector<4x128x128xf32>
    tpu.vector_store %arg6[%c0_16, %c0_17, %c0_18], %19 {strides = array<i32>} : memref<4x128x128xf32, #tpu.memory_space<vmem>>, vector<4x128x128xf32>,
    return
  }
  func.func @transform_0(%arg0: i32, %arg1: i32) -> i32 {
    %c0_i32 = arith.constant 0 : i32
    %c0_i32_0 = arith.constant 0 : i32
    return %c0_i32 : i32
  }
  func.func @transform_1(%arg0: i32, %arg1: i32) -> (i32, i32, i32) {
    %c0_i32 = arith.constant 0 : i32
    %c0_i32_0 = arith.constant 0 : i32
    return %arg0, %arg1, %c0_i32 : i32, i32, i32
  }
  func.func @transform_2(%arg0: i32, %arg1: i32) -> (i32, i32, i32) {
    %c0_i32 = arith.constant 0 : i32
    %c0_i32_0 = arith.constant 0 : i32
    %c0_i32_1 = arith.constant 0 : i32
    return %arg0, %c0_i32, %c0_i32_0 : i32, i32, i32
  }
  func.func @transform_3(%arg0: i32, %arg1: i32) -> (i32, i32, i32) {
    %c0_i32 = arith.constant 0 : i32
    %c0_i32_0 = arith.constant 0 : i32
    %c0_i32_1 = arith.constant 0 : i32
    return %arg0, %c0_i32, %c0_i32_0 : i32, i32, i32
  }
  func.func @transform_4(%arg0: i32, %arg1: i32) -> (i32, i32, i32) {
    %c0_i32 = arith.constant 0 : i32
    %c0_i32_0 = arith.constant 0 : i32
    return %arg0, %arg1, %c0_i32 : i32, i32, i32
  }
  func.func @transform_5(%arg0: i32, %arg1: i32) -> (i32, i32, i32) {
    %c0_i32 = arith.constant 0 : i32
    %c0_i32_0 = arith.constant 0 : i32
    return %arg0, %arg1, %c0_i32 : i32, i32, i32
  }
}

</mosaic_0001>

<llo_original>
// kernel: tpu_custom_call.1
$region0: #{tpu_custom_call.1}
  #allocation0 [shape = 'u32[]', space=smem, size = 0x4, offset = 0x4, fixed_abs, tag = 'smem constant byte address 0x4 - core index']
  #allocation1 [shape = 'u32[144,128]{1,0:T(1,128)}', space=vmem, size = 0x12000, scoped, tag = 'internal scratch']
  #allocation2 [shape = 'f32[1]{0:T(128)S(6)}', space=smem, size = 0x200, scoped, tag = 'scoped memory for tpu_custom_call.1']
  %s0 = inlined_call_operand.<no memory space> [shape: f32[1], index: 0, kind: input, shape index: {}]
  %s1 = inlined_call_operand.hbm [shape: f32[8,128,128], index: 1, kind: input, shape index: {}]
  %s2 = inlined_call_operand.hbm [shape: f32[8,128,128], index: 2, kind: input, shape index: {}]
  %s3 = inlined_call_operand.hbm [shape: f32[8,128,128], index: 3, kind: input, shape index: {}]
  %s4 = inlined_call_operand.hbm [shape: f32[8,128,128], index: 4, kind: output, shape index: {0}]
  %s5 = inlined_call_operand.hbm [shape: f32[8,128,128], index: 5, kind: output, shape index: {1}]
  %6 = xla_tuple %s4, %s5
  %s7 = sld [smem:[#allocation0]]
  $region69: #{tpu_custom_call.1} parent=0
    _
  %s9 = ssub.s32 1, %s7
  %s10 = scalar_select 0, %s9, %s7
  %11 = sst [smem:[#allocation2]] %s0
  $region1: #{tpu_custom_call.1} parent=0
    #allocation3 [shape = 'u8[524288]{0}', space=vmem, size = 0x80000, scoped, tag = 'input window, operand 1']
    #allocation4 [shape = 's32[2]{0}', space=sflag, size = 0x8, scoped, tag = 'scoped memory for tpu_custom_call.1']
    #allocation5 [shape = 's32[2]{0}', space=sflag, size = 0x8, scoped, tag = 'scoped memory for tpu_custom_call.1']
    #allocation6 [shape = 'u8[524288]{0}', space=vmem, size = 0x80000, scoped, tag = 'input window, operand 2']
    #allocation7 [shape = 's32[2]{0}', space=sflag, size = 0x8, scoped, tag = 'scoped memory for tpu_custom_call.1']
    #allocation8 [shape = 'u8[524288]{0}', space=vmem, size = 0x80000, scoped, tag = 'input window, operand 3']
    #allocation9 [shape = 'u8[524288]{0}', space=vmem, size = 0x80000, scoped, tag = 'output window, operand 0']
    #allocation10 [shape = 'u8[524288]{0}', space=vmem, size = 0x80000, scoped, tag = 'output window, operand 1']
    #allocation11 [shape = 's32[2]{0}', space=sflag, size = 0x8, scoped, tag = 'scoped memory for tpu_custom_call.1']
    %12 = vsyncpa [#allocation4], 0
    %s13 = scalar_lea.sflag [#allocation4], 1
    %14 = vsyncpa %s13, 0
    %15 = vsyncpa [#allocation7], 0
    %s16 = scalar_lea.sflag [#allocation7], 1
    %17 = vsyncpa %s16, 0
    %18 = vsyncpa [#allocation5], 0
    %s19 = scalar_lea.sflag [#allocation5], 1
    %20 = vsyncpa %s19, 0
    %21 = vsyncpa [#allocation11], 0
    %s22 = scalar_lea.sflag [#allocation11], 1
    %23 = vsyncpa %s22, 0
    loop: start=0, step=1, limit=4
    $region2: #{tpu_custom_call.1} parent=1 // loop_pre_header
      _
    $region3: #{tpu_custom_call.1} parent=1 // loop_header
      %s25 = sphi 0, %s29
      %p26 = scmp.ge.s32.totalorder %s25, 4
      %s32 = sphi 0, %s44
      %s33 = sphi 0, %s40
      %s34 = sphi 0, %s32
      %s35 = sphi 0, %s33
      %s36 = sphi 0, %s34
      %s37 = sphi 0, %s35
      %s45 = sphi 0, %s45
      %s47 = sphi 0, %s45
      %s48 = sphi 0, %s47
      %s62 = sphi 0, %s48
      %s70 = sphi 0, %s72
      %s73 = sphi 0, %s70
      %s74 = sphi 0, %s73
      %s90 = sphi 0, %s74
      %s96 = sphi 0, %s98
      %s99 = sphi 0, %s96
      %s100 = sphi 0, %s99
      %s116 = sphi 0, %s100
      %s122 = sphi 0, %s124
      %s125 = sphi 0, %s122
      %s126 = sphi 0, %s125
      %s142 = sphi 0, %s126
      %s150 = sphi 0, %s152
      %s153 = sphi 0, %s150
      %s154 = sphi 0, %s153
      %s170 = sphi 0, %s154
      %s178 = sphi 0, %s180
      %s181 = sphi 0, %s178
      %s182 = sphi 0, %s181
      %s198 = sphi 0, %s182
    $region4: #{tpu_custom_call.1} parent=1 // loop_header_branch
      %28 = sbr.rel (%p26) target = $region8
    $region5: #{tpu_custom_call.1} parent=1 // loop_body
      %s30 = ssub.s32 %s25, 1
      %s31 = ssub.s32 %s25, 2
      %s38 = sadd.s32 1, %s33
      %p39 = scmp.ge.s32.totalorder %s38, 1
      %s40 = scalar_select %p39, 0, %s38
      %s41 = sadd.s32 1, %s32
      %s42 = scalar_select %p39, %s41, %s32
      %p43 = scmp.ge.s32.totalorder %s42, 2
      %s44 = scalar_select %p43, 0, %s42
      %s46 = sadd.s32 %s45, 1
      %p49 = scmp.eq.s32.totalorder %s25, 1
      %p50 = scmp.ne.s32.totalorder %s45, %s47
      %p51 = scmp.eq.s32.totalorder %s25, 0
      %p52 = por %p50, %p51
      %p53 = scmp.ne.s32.totalorder %s45, %s47
      %p54 = scmp.eq.s32.totalorder %s30, 1
      %p55 = por %p53, %p54
      %p56 = scmp.ne.s32.totalorder %s47, %s48
      %p57 = scmp.eq.s32.totalorder %s30, 0
      %p58 = por %p56, %p57
      %p59 = scmp.ne.s32.totalorder %s47, %s48
      %p60 = scmp.eq.s32.totalorder %s31, 1
      %p61 = por %p59, %p60
      %p63 = scmp.ne.s32.totalorder %s48, %s62
      %p64 = scmp.eq.s32.totalorder %s31, 0
      %p65 = por %p63, %p64
      %s66 = ssub.s32 %s32, %s44
      %s67 = ssub.s32 %s33, %s40
      %s68 = sor.u32 %s66, %s67
      %p69 = scmp.eq.s32.totalorder %s68, 0
      %s71 = sadd.s32 %s70, 1
      %s72 = scalar_select %p69, %s70, %s71
      %p75 = pneg %p69
      %p76 = scmp.eq.s32.totalorder %s25, 1
      %p77 = por %p75, %p76
      %p78 = scmp.ne.s32.totalorder %s70, %s73
      %p79 = scmp.eq.s32.totalorder %s25, 0
      %p80 = por %p78, %p79
      %p81 = scmp.ne.s32.totalorder %s70, %s73
      %p82 = scmp.eq.s32.totalorder %s30, 1
      %p83 = por %p81, %p82
      %p84 = scmp.ne.s32.totalorder %s73, %s74
      %p85 = scmp.eq.s32.totalorder %s30, 0
      %p86 = por %p84, %p85
      %p87 = scmp.ne.s32.totalorder %s73, %s74
      %p88 = scmp.eq.s32.totalorder %s31, 1
      %p89 = por %p87, %p88
      %p91 = scmp.ne.s32.totalorder %s74, %s90
      %p92 = scmp.eq.s32.totalorder %s31, 0
      %p93 = por %p91, %p92
      %s94 = ssub.s32 %s32, %s44
      %p95 = scmp.eq.s32.totalorder %s94, 0
      %s97 = sadd.s32 %s96, 1
      %s98 = scalar_select %p95, %s96, %s97
      %p101 = pneg %p95
      %p102 = scmp.eq.s32.totalorder %s25, 1
      %p103 = por %p101, %p102
      %p104 = scmp.ne.s32.totalorder %s96, %s99
      %p105 = scmp.eq.s32.totalorder %s25, 0
      %p106 = por %p104, %p105
      %p107 = scmp.ne.s32.totalorder %s96, %s99
      %p108 = scmp.eq.s32.totalorder %s30, 1
      %p109 = por %p107, %p108
      %p110 = scmp.ne.s32.totalorder %s99, %s100
      %p111 = scmp.eq.s32.totalorder %s30, 0
      %p112 = por %p110, %p111
      %p113 = scmp.ne.s32.totalorder %s99, %s100
      %p114 = scmp.eq.s32.totalorder %s31, 1
      %p115 = por %p113, %p114
      %p117 = scmp.ne.s32.totalorder %s100, %s116
      %p118 = scmp.eq.s32.totalorder %s31, 0
      %p119 = por %p117, %p118
      %s120 = ssub.s32 %s32, %s44
      %p121 = scmp.eq.s32.totalorder %s120, 0
      %s123 = sadd.s32 %s122, 1
      %s124 = scalar_select %p121, %s122, %s123
      %p127 = pneg %p121
      %p128 = scmp.eq.s32.totalorder %s25, 1
      %p129 = por %p127, %p128
      %p130 = scmp.ne.s32.totalorder %s122, %s125
      %p131 = scmp.eq.s32.totalorder %s25, 0
      %p132 = por %p130, %p131
      %p133 = scmp.ne.s32.totalorder %s122, %s125
      %p134 = scmp.eq.s32.totalorder %s30, 1
      %p135 = por %p133, %p134
      %p136 = scmp.ne.s32.totalorder %s125, %s126
      %p137 = scmp.eq.s32.totalorder %s30, 0
      %p138 = por %p136, %p137
      %p139 = scmp.ne.s32.totalorder %s125, %s126
      %p140 = scmp.eq.s32.totalorder %s31, 1
      %p141 = por %p139, %p140
      %p143 = scmp.ne.s32.totalorder %s126, %s142
      %p144 = scmp.eq.s32.totalorder %s31, 0
      %p145 = por %p143, %p144
      %s146 = ssub.s32 %s32, %s44
      %s147 = ssub.s32 %s33, %s40
      %s148 = sor.u32 %s146, %s147
      %p149 = scmp.eq.s32.totalorder %s148, 0
      %s151 = sadd.s32 %s150, 1
      %s152 = scalar_select %p149, %s150, %s151
      %p155 = pneg %p149
      %p156 = scmp.eq.s32.totalorder %s25, 1
      %p157 = por %p155, %p156
      %p158 = scmp.ne.s32.totalorder %s150, %s153
      %p159 = scmp.eq.s32.totalorder %s25, 0
      %p160 = por %p158, %p159
      %p161 = scmp.ne.s32.totalorder %s150, %s153
      %p162 = scmp.eq.s32.totalorder %s30, 1
      %p163 = por %p161, %p162
      %p164 = scmp.ne.s32.totalorder %s153, %s154
      %p165 = scmp.eq.s32.totalorder %s30, 0
      %p166 = por %p164, %p165
      %p167 = scmp.ne.s32.totalorder %s153, %s154
      %p168 = scmp.eq.s32.totalorder %s31, 1
      %p169 = por %p167, %p168
      %p171 = scmp.ne.s32.totalorder %s154, %s170
      %p172 = scmp.eq.s32.totalorder %s31, 0
      %p173 = por %p171, %p172
      %s174 = ssub.s32 %s32, %s44
      %s175 = ssub.s32 %s33, %s40
      %s176 = sor.u32 %s174, %s175
      %p177 = scmp.eq.s32.totalorder %s176, 0
      %s179 = sadd.s32 %s178, 1
      %s180 = scalar_select %p177, %s178, %s179
      %p183 = pneg %p177
      %p184 = scmp.eq.s32.totalorder %s25, 1
      %p185 = por %p183, %p184
      %p186 = scmp.ne.s32.totalorder %s178, %s181
      %p187 = scmp.eq.s32.totalorder %s25, 0
      %p188 = por %p186, %p187
      %p189 = scmp.ne.s32.totalorder %s178, %s181
      %p190 = scmp.eq.s32.totalorder %s30, 1
      %p191 = por %p189, %p190
      %p192 = scmp.ne.s32.totalorder %s181, %s182
      %p193 = scmp.eq.s32.totalorder %s30, 0
      %p194 = por %p192, %p193
      %p195 = scmp.ne.s32.totalorder %s181, %s182
      %p196 = scmp.eq.s32.totalorder %s31, 1
      %p197 = por %p195, %p196
      %p199 = scmp.ne.s32.totalorder %s182, %s198
      %p200 = scmp.eq.s32.totalorder %s31, 0
      %p201 = por %p199, %p200
      %p202 = scmp.le.s32.totalorder 1, %s25
      %p203 = scmp.lt.s32.totalorder %s25, 3
      %p204 = pnand %p202, %p203
      %p205 = pneg %p204
      // Predicated region
      $region9: #{tpu_custom_call.1} parent=5 // pred_check
        _
      $region10: #{tpu_custom_call.1} parent=5 // pred_check_branch
        %207 = sbr.rel (%p204) target = $region12
      $region11: #{tpu_custom_call.1} parent=5 // pred_region
        %s208 = ssub.s32 %s25, 1
        // Predicated region
        $region13: #{tpu_custom_call.1} parent=11 // pred_check
          %p209 = pneg %p58
        $region14: #{tpu_custom_call.1} parent=11 // pred_check_branch
          %211 = sbr.rel (%p209) target = $region16
        $region15: #{tpu_custom_call.1} parent=11 // pred_region
          _
        $region16: #{tpu_custom_call.1} parent=11 // pred_fallthru
          _
      $region12: #{tpu_custom_call.1} parent=5 // pred_fallthru
        _
      %p212 = scmp.lt.s32.totalorder %s25, 2
      // Predicated region
      $region17: #{tpu_custom_call.1} parent=5 // pred_check
        %p213 = pneg %p212
      $region18: #{tpu_custom_call.1} parent=5 // pred_check_branch
        %215 = sbr.rel (%p213) target = $region20
      $region19: #{tpu_custom_call.1} parent=5 // pred_region
        // Predicated region
        $region21: #{tpu_custom_call.1} parent=19 // pred_check
          %p216 = pneg %p80
        $region22: #{tpu_custom_call.1} parent=19 // pred_check_branch
          %218 = sbr.rel (%p216) target = $region24
        $region23: #{tpu_custom_call.1} parent=19 // pred_region
          %s219 = sand.u32 %s70, 1
          %s220 = scalar_lea.sflag [#allocation4], %s219
          %s221 = sand.u32 %s70, 1
          %s222 = smul.addr %s221, 512
          %s223 = scalar_lea.vmem [#allocation3], %s222
          %s224 = smul.u32 4, %s32
          %s225 = smul.u32 16, %s33
          %s227 = ssub.s32 8192, 8192
          %228 = vsyncadd %s220, %s227
          %s229 = smul.addr %s224, 16
          %s230 = sadd.s32 %s225, %s229
          %s231 = smul.addr %s230, 128
          %s232 = scalar_lea.hbm %s1, %s231
          %s233 = sshll.u32 %s223, 4
          %s234 = int_to_ptr.vmem [resolvable:$true] %s233
          %239 = dma.hbm_to_vmem [thread:$0]  %s232, 8192, %s234, %s220, 128, 128, 8
        $region24: #{tpu_custom_call.1} parent=19 // pred_fallthru
          _
        // Predicated region
        $region25: #{tpu_custom_call.1} parent=19 // pred_check
          %p240 = pneg %p106
        $region26: #{tpu_custom_call.1} parent=19 // pred_check_branch
          %242 = sbr.rel (%p240) target = $region28
        $region27: #{tpu_custom_call.1} parent=19 // pred_region
          %s243 = sand.u32 %s25, 1
          %s244 = scalar_lea.sflag [#allocation7], %s243
          %s245 = sand.u32 %s96, 1
          %s246 = smul.addr %s245, 512
          %s247 = scalar_lea.vmem [#allocation6], %s246
          %s248 = smul.u32 4, %s32
          %s250 = ssub.s32 8192, 8192
          %251 = vsyncadd %s244, %s250
          %s252 = smul.addr %s248, 16
          %s253 = smul.addr %s252, 128
          %s254 = scalar_lea.hbm %s2, %s253
          %s255 = sshll.u32 %s247, 4
          %s256 = int_to_ptr.vmem [resolvable:$true] %s255
          %261 = dma.hbm_to_vmem [thread:$0]  %s254, 8192, %s256, %s244, 128, 128, 8
        $region28: #{tpu_custom_call.1} parent=19 // pred_fallthru
          _
        // Predicated region
        $region29: #{tpu_custom_call.1} parent=19 // pred_check
          %p262 = pneg %p132
        $region30: #{tpu_custom_call.1} parent=19 // pred_check_branch
          %264 = sbr.rel (%p262) target = $region32
        $region31: #{tpu_custom_call.1} parent=19 // pred_region
          %s265 = sand.u32 %s25, 1
          %s266 = scalar_lea.sflag [#allocation7], %s265
          %s267 = sand.u32 %s122, 1
          %s268 = smul.addr %s267, 512
          %s269 = scalar_lea.vmem [#allocation8], %s268
          %s270 = smul.u32 4, %s32
          %s272 = ssub.s32 8192, 8192
          %273 = vsyncadd %s266, %s272
          %s274 = smul.addr %s270, 16
          %s275 = smul.addr %s274, 128
          %s276 = scalar_lea.hbm %s3, %s275
          %s277 = sshll.u32 %s269, 4
          %s278 = int_to_ptr.vmem [resolvable:$true] %s277
          %283 = dma.hbm_to_vmem [thread:$0]  %s276, 8192, %s278, %s266, 128, 128, 8
        $region32: #{tpu_custom_call.1} parent=19 // pred_fallthru
          _
      $region20: #{tpu_custom_call.1} parent=5 // pred_fallthru
        _
      %p284 = scmp.le.s32.totalorder 1, %s25
      %p285 = scmp.lt.s32.totalorder %s25, 3
      %p286 = pnand %p284, %p285
      %p287 = pneg %p286
      // Predicated region
      $region33: #{tpu_custom_call.1} parent=5 // pred_check
        _
      $region34: #{tpu_custom_call.1} parent=5 // pred_check_branch
        %289 = sbr.rel (%p286) target = $region36
      $region35: #{tpu_custom_call.1} parent=5 // pred_region
        %s290 = ssub.s32 %s25, 1
        %s291 = sand.u32 %s73, 1
        %s292 = scalar_lea.sflag [#allocation4], %s291
        %s293 = sand.u32 %s73, 1
        %s294 = smul.addr %s293, 512
        %s295 = scalar_lea.vmem [#allocation3], %s294
        // Predicated region
        $region37: #{tpu_custom_call.1} parent=35 // pred_check
          %p296 = pneg %p86
        $region38: #{tpu_custom_call.1} parent=35 // pred_check_branch
          %298 = sbr.rel (%p296) target = $region40
        $region39: #{tpu_custom_call.1} parent=35 // pred_region
          %299 = dma.done %s292, 8192
        $region40: #{tpu_custom_call.1} parent=35 // pred_fallthru
          _
        %s300 = sand.u32 %s30, 1
        %s301 = scalar_lea.sflag [#allocation7], %s300
        %s302 = sand.u32 %s99, 1
        %s303 = smul.addr %s302, 512
        %s304 = scalar_lea.vmem [#allocation6], %s303
        // Predicated region
        $region41: #{tpu_custom_call.1} parent=35 // pred_check
          %p305 = pneg %p112
        $region42: #{tpu_custom_call.1} parent=35 // pred_check_branch
          %307 = sbr.rel (%p305) target = $region44
        $region43: #{tpu_custom_call.1} parent=35 // pred_region
          %308 = dma.done %s301, 8192
        $region44: #{tpu_custom_call.1} parent=35 // pred_fallthru
          _
        %s309 = sand.u32 %s30, 1
        %s310 = scalar_lea.sflag [#allocation7], %s309
        %s311 = sand.u32 %s125, 1
        %s312 = smul.addr %s311, 512
        %s313 = scalar_lea.vmem [#allocation8], %s312
        // Predicated region
        $region45: #{tpu_custom_call.1} parent=35 // pred_check
          %p314 = pneg %p138
        $region46: #{tpu_custom_call.1} parent=35 // pred_check_branch
          %316 = sbr.rel (%p314) target = $region48
        $region47: #{tpu_custom_call.1} parent=35 // pred_region
          %317 = dma.done %s310, 8192
        $region48: #{tpu_custom_call.1} parent=35 // pred_fallthru
          _
        %p318 = pneg %p58
        %p319 = pneg %p55
        %s320 = sand.u32 %s73, 1
        %s321 = scalar_lea.sflag [#allocation4], %s320
        %s322 = sand.u32 %s73, 1
        %s323 = smul.addr %s322, 512
        %s324 = scalar_lea.vmem [#allocation3], %s323
        %p325 = pneg %p86
        %p326 = pneg %p83
        %s327 = sand.u32 %s30, 1
        %s328 = scalar_lea.sflag [#allocation7], %s327
        %s329 = sand.u32 %s99, 1
        %s330 = smul.addr %s329, 512
        %s331 = scalar_lea.vmem [#allocation6], %s330
        %p332 = pneg %p112
        %p333 = pneg %p109
        %s334 = sand.u32 %s30, 1
        %s335 = scalar_lea.sflag [#allocation7], %s334
        %s336 = sand.u32 %s125, 1
        %s337 = smul.addr %s336, 512
        %s338 = scalar_lea.vmem [#allocation8], %s337
        %p339 = pneg %p138
        %p340 = pneg %p135
        %p341 = pneg %p166
        %p342 = pneg %p163
        %s343 = sand.u32 %s153, 1
        %s344 = scalar_lea.sflag [#allocation5], %s343
        %s345 = sand.u32 %s153, 1
        %s346 = smul.addr %s345, 512
        %s347 = scalar_lea.vmem [#allocation9], %s346
        %p348 = pneg %p194
        %p349 = pneg %p191
        %s350 = sand.u32 %s181, 1
        %s351 = scalar_lea.sflag [#allocation11], %s350
        %s352 = sand.u32 %s181, 1
        %s353 = smul.addr %s352, 512
        %s354 = scalar_lea.vmem [#allocation10], %s353
        %s355 = smul.u32 4, %s34
        %s356 = smul.u32 16, %s35
        %s357 = smul.u32 4, %s34
        %s358 = smul.u32 4, %s34
        %s359 = smul.u32 4, %s34
        %s360 = smul.u32 16, %s35
        %s361 = smul.u32 4, %s34
        %s362 = smul.u32 16, %s35
        %s363 = sld [smem:[#allocation2]]
        %v364 = vstv %s363
        %v365 = vrcp.pop %v364
        %s366 = vtos %v365
        %v367 = vld [vmem:[%s295] sm:$0xff]
        %v368 = vld [vmem:[%s295 + $0x8] sm:$0xff]
        %v369 = vld [vmem:[%s295 + $0x10] sm:$0xff]
        %v370 = vld [vmem:[%s295 + $0x18] sm:$0xff]
        %v371 = vld [vmem:[%s295 + $0x20] sm:$0xff]
        %v372 = vld [vmem:[%s295 + $0x28] sm:$0xff]
        %v373 = vld [vmem:[%s295 + $0x30] sm:$0xff]
        %v374 = vld [vmem:[%s295 + $0x38] sm:$0xff]
        %v375 = vld [vmem:[%s295 + $0x40] sm:$0xff]
        %v376 = vld [vmem:[%s295 + $0x48] sm:$0xff]
        %v377 = vld [vmem:[%s295 + $0x50] sm:$0xff]
        %v378 = vld [vmem:[%s295 + $0x58] sm:$0xff]
        %v379 = vld [vmem:[%s295 + $0x60] sm:$0xff]
        %v380 = vld [vmem:[%s295 + $0x68] sm:$0xff]
        %v381 = vld [vmem:[%s295 + $0x70] sm:$0xff]
        %v382 = vld [vmem:[%s295 + $0x78] sm:$0xff]
        %v383 = vld [vmem:[%s295 + $0x80] sm:$0xff]
        %v384 = vld [vmem:[%s295 + $0x88] sm:$0xff]
        %v385 = vld [vmem:[%s295 + $0x90] sm:$0xff]
        %v386 = vld [vmem:[%s295 + $0x98] sm:$0xff]
        %v387 = vld [vmem:[%s295 + $0xa0] sm:$0xff]
        %v388 = vld [vmem:[%s295 + $0xa8] sm:$0xff]
        %v389 = vld [vmem:[%s295 + $0xb0] sm:$0xff]
        %v390 = vld [vmem:[%s295 + $0xb8] sm:$0xff]
        %v391 = vld [vmem:[%s295 + $0xc0] sm:$0xff]
        %v392 = vld [vmem:[%s295 + $0xc8] sm:$0xff]
        %v393 = vld [vmem:[%s295 + $0xd0] sm:$0xff]
        %v394 = vld [vmem:[%s295 + $0xd8] sm:$0xff]
        %v395 = vld [vmem:[%s295 + $0xe0] sm:$0xff]
        %v396 = vld [vmem:[%s295 + $0xe8] sm:$0xff]
        %v397 = vld [vmem:[%s295 + $0xf0] sm:$0xff]
        %v398 = vld [vmem:[%s295 + $0xf8] sm:$0xff]
        %v399 = vld [vmem:[%s295 + $0x100] sm:$0xff]
        %v400 = vld [vmem:[%s295 + $0x108] sm:$0xff]
        %v401 = vld [vmem:[%s295 + $0x110] sm:$0xff]
        %v402 = vld [vmem:[%s295 + $0x118] sm:$0xff]
        %v403 = vld [vmem:[%s295 + $0x120] sm:$0xff]
        %v404 = vld [vmem:[%s295 + $0x128] sm:$0xff]
        %v405 = vld [vmem:[%s295 + $0x130] sm:$0xff]
        %v406 = vld [vmem:[%s295 + $0x138] sm:$0xff]
        %v407 = vld [vmem:[%s295 + $0x140] sm:$0xff]
        %v408 = vld [vmem:[%s295 + $0x148] sm:$0xff]
        %v409 = vld [vmem:[%s295 + $0x150] sm:$0xff]
        %v410 = vld [vmem:[%s295 + $0x158] sm:$0xff]
        %v411 = vld [vmem:[%s295 + $0x160] sm:$0xff]
        %v412 = vld [vmem:[%s295 + $0x168] sm:$0xff]
        %v413 = vld [vmem:[%s295 + $0x170] sm:$0xff]
        %v414 = vld [vmem:[%s295 + $0x178] sm:$0xff]
        %v415 = vld [vmem:[%s295 + $0x180] sm:$0xff]
        %v416 = vld [vmem:[%s295 + $0x188] sm:$0xff]
        %v417 = vld [vmem:[%s295 + $0x190] sm:$0xff]
        %v418 = vld [vmem:[%s295 + $0x198] sm:$0xff]
        %v419 = vld [vmem:[%s295 + $0x1a0] sm:$0xff]
        %v420 = vld [vmem:[%s295 + $0x1a8] sm:$0xff]
        %v421 = vld [vmem:[%s295 + $0x1b0] sm:$0xff]
        %v422 = vld [vmem:[%s295 + $0x1b8] sm:$0xff]
        %v423 = vld [vmem:[%s295 + $0x1c0] sm:$0xff]
        %v424 = vld [vmem:[%s295 + $0x1c8] sm:$0xff]
        %v425 = vld [vmem:[%s295 + $0x1d0] sm:$0xff]
        %v426 = vld [vmem:[%s295 + $0x1d8] sm:$0xff]
        %v427 = vld [vmem:[%s295 + $0x1e0] sm:$0xff]
        %v428 = vld [vmem:[%s295 + $0x1e8] sm:$0xff]
        %v429 = vld [vmem:[%s295 + $0x1f0] sm:$0xff]
        %v430 = vld [vmem:[%s295 + $0x1f8] sm:$0xff]
        %v431 = vstv %s366
        %v432 = vmul.f32 %v367, %v431
        %v433 = vmul.f32 %v368, %v431
        %v434 = vmul.f32 %v369, %v431
        %v435 = vmul.f32 %v370, %v431
        %v436 = vmul.f32 %v371, %v431
        %v437 = vmul.f32 %v372, %v431
        %v438 = vmul.f32 %v373, %v431
        %v439 = vmul.f32 %v374, %v431
        %v440 = vmul.f32 %v375, %v431
        %v441 = vmul.f32 %v376, %v431
        %v442 = vmul.f32 %v377, %v431
        %v443 = vmul.f32 %v378, %v431
        %v444 = vmul.f32 %v379, %v431
        %v445 = vmul.f32 %v380, %v431
        %v446 = vmul.f32 %v381, %v431
        %v447 = vmul.f32 %v382, %v431
        %v448 = vmul.f32 %v383, %v431
        %v449 = vmul.f32 %v384, %v431
        %v450 = vmul.f32 %v385, %v431
        %v451 = vmul.f32 %v386, %v431
        %v452 = vmul.f32 %v387, %v431
        %v453 = vmul.f32 %v388, %v431
        %v454 = vmul.f32 %v389, %v431
        %v455 = vmul.f32 %v390, %v431
        %v456 = vmul.f32 %v391, %v431
        %v457 = vmul.f32 %v392, %v431
        %v458 = vmul.f32 %v393, %v431
        %v459 = vmul.f32 %v394, %v431
        %v460 = vmul.f32 %v395, %v431
        %v461 = vmul.f32 %v396, %v431
        %v462 = vmul.f32 %v397, %v431
        %v463 = vmul.f32 %v398, %v431
        %v464 = vmul.f32 %v399, %v431
        %v465 = vmul.f32 %v400, %v431
        %v466 = vmul.f32 %v401, %v431
        %v467 = vmul.f32 %v402, %v431
        %v468 = vmul.f32 %v403, %v431
        %v469 = vmul.f32 %v404, %v431
        %v470 = vmul.f32 %v405, %v431
        %v471 = vmul.f32 %v406, %v431
        %v472 = vmul.f32 %v407, %v431
        %v473 = vmul.f32 %v408, %v431
        %v474 = vmul.f32 %v409, %v431
        %v475 = vmul.f32 %v410, %v431
        %v476 = vmul.f32 %v411, %v431
        %v477 = vmul.f32 %v412, %v431
        %v478 = vmul.f32 %v413, %v431
        %v479 = vmul.f32 %v414, %v431
        %v480 = vmul.f32 %v415, %v431
        %v481 = vmul.f32 %v416, %v431
        %v482 = vmul.f32 %v417, %v431
        %v483 = vmul.f32 %v418, %v431
        %v484 = vmul.f32 %v419, %v431
        %v485 = vmul.f32 %v420, %v431
        %v486 = vmul.f32 %v421, %v431
        %v487 = vmul.f32 %v422, %v431
        %v488 = vmul.f32 %v423, %v431
        %v489 = vmul.f32 %v424, %v431
        %v490 = vmul.f32 %v425, %v431
        %v491 = vmul.f32 %v426, %v431
        %v492 = vmul.f32 %v427, %v431
        %v493 = vmul.f32 %v428, %v431
        %v494 = vmul.f32 %v429, %v431
        %v495 = vmul.f32 %v430, %v431
        %v496 = vld [vmem:[%s304] sm:$0xff]
        %v497 = vld [vmem:[%s304 + $0x8] sm:$0xff]
        %v498 = vld [vmem:[%s304 + $0x10] sm:$0xff]
        %v499 = vld [vmem:[%s304 + $0x18] sm:$0xff]
        %v500 = vld [vmem:[%s304 + $0x20] sm:$0xff]
        %v501 = vld [vmem:[%s304 + $0x28] sm:$0xff]
        %v502 = vld [vmem:[%s304 + $0x30] sm:$0xff]
        %v503 = vld [vmem:[%s304 + $0x38] sm:$0xff]
        %v504 = vld [vmem:[%s304 + $0x40] sm:$0xff]
        %v505 = vld [vmem:[%s304 + $0x48] sm:$0xff]
        %v506 = vld [vmem:[%s304 + $0x50] sm:$0xff]
        %v507 = vld [vmem:[%s304 + $0x58] sm:$0xff]
        %v508 = vld [vmem:[%s304 + $0x60] sm:$0xff]
        %v509 = vld [vmem:[%s304 + $0x68] sm:$0xff]
        %v510 = vld [vmem:[%s304 + $0x70] sm:$0xff]
        %v511 = vld [vmem:[%s304 + $0x78] sm:$0xff]
        %v512 = vld [vmem:[%s304 + $0x80] sm:$0xff]
        %v513 = vld [vmem:[%s304 + $0x88] sm:$0xff]
        %v514 = vld [vmem:[%s304 + $0x90] sm:$0xff]
        %v515 = vld [vmem:[%s304 + $0x98] sm:$0xff]
        %v516 = vld [vmem:[%s304 + $0xa0] sm:$0xff]
        %v517 = vld [vmem:[%s304 + $0xa8] sm:$0xff]
        %v518 = vld [vmem:[%s304 + $0xb0] sm:$0xff]
        %v519 = vld [vmem:[%s304 + $0xb8] sm:$0xff]
        %v520 = vld [vmem:[%s304 + $0xc0] sm:$0xff]
        %v521 = vld [vmem:[%s304 + $0xc8] sm:$0xff]
        %v522 = vld [vmem:[%s304 + $0xd0] sm:$0xff]
        %v523 = vld [vmem:[%s304 + $0xd8] sm:$0xff]
        %v524 = vld [vmem:[%s304 + $0xe0] sm:$0xff]
        %v525 = vld [vmem:[%s304 + $0xe8] sm:$0xff]
        %v526 = vld [vmem:[%s304 + $0xf0] sm:$0xff]
        %v527 = vld [vmem:[%s304 + $0xf8] sm:$0xff]
        %v528 = vld [vmem:[%s304 + $0x100] sm:$0xff]
        %v529 = vld [vmem:[%s304 + $0x108] sm:$0xff]
        %v530 = vld [vmem:[%s304 + $0x110] sm:$0xff]
        %v531 = vld [vmem:[%s304 + $0x118] sm:$0xff]
        %v532 = vld [vmem:[%s304 + $0x120] sm:$0xff]
        %v533 = vld [vmem:[%s304 + $0x128] sm:$0xff]
        %v534 = vld [vmem:[%s304 + $0x130] sm:$0xff]
        %v535 = vld [vmem:[%s304 + $0x138] sm:$0xff]
        %v536 = vld [vmem:[%s304 + $0x140] sm:$0xff]
        %v537 = vld [vmem:[%s304 + $0x148] sm:$0xff]
        %v538 = vld [vmem:[%s304 + $0x150] sm:$0xff]
        %v539 = vld [vmem:[%s304 + $0x158] sm:$0xff]
        %v540 = vld [vmem:[%s304 + $0x160] sm:$0xff]
        %v541 = vld [vmem:[%s304 + $0x168] sm:$0xff]
        %v542 = vld [vmem:[%s304 + $0x170] sm:$0xff]
        %v543 = vld [vmem:[%s304 + $0x178] sm:$0xff]
        %v544 = vld [vmem:[%s304 + $0x180] sm:$0xff]
        %v545 = vld [vmem:[%s304 + $0x188] sm:$0xff]
        %v546 = vld [vmem:[%s304 + $0x190] sm:$0xff]
        %v547 = vld [vmem:[%s304 + $0x198] sm:$0xff]
        %v548 = vld [vmem:[%s304 + $0x1a0] sm:$0xff]
        %v549 = vld [vmem:[%s304 + $0x1a8] sm:$0xff]
        %v550 = vld [vmem:[%s304 + $0x1b0] sm:$0xff]
        %v551 = vld [vmem:[%s304 + $0x1b8] sm:$0xff]
        %v552 = vld [vmem:[%s304 + $0x1c0] sm:$0xff]
        %v553 = vld [vmem:[%s304 + $0x1c8] sm:$0xff]
        %v554 = vld [vmem:[%s304 + $0x1d0] sm:$0xff]
        %v555 = vld [vmem:[%s304 + $0x1d8] sm:$0xff]
        %v556 = vld [vmem:[%s304 + $0x1e0] sm:$0xff]
        %v557 = vld [vmem:[%s304 + $0x1e8] sm:$0xff]
        %v558 = vld [vmem:[%s304 + $0x1f0] sm:$0xff]
        %v559 = vld [vmem:[%s304 + $0x1f8] sm:$0xff]
        %v560 = vld [vmem:[%s313] sm:$0xff]
        %v561 = vld [vmem:[%s313 + $0x8] sm:$0xff]
        %v562 = vld [vmem:[%s313 + $0x10] sm:$0xff]
        %v563 = vld [vmem:[%s313 + $0x18] sm:$0xff]
        %v564 = vld [vmem:[%s313 + $0x20] sm:$0xff]
        %v565 = vld [vmem:[%s313 + $0x28] sm:$0xff]
        %v566 = vld [vmem:[%s313 + $0x30] sm:$0xff]
        %v567 = vld [vmem:[%s313 + $0x38] sm:$0xff]
        %v568 = vld [vmem:[%s313 + $0x40] sm:$0xff]
        %v569 = vld [vmem:[%s313 + $0x48] sm:$0xff]
        %v570 = vld [vmem:[%s313 + $0x50] sm:$0xff]
        %v571 = vld [vmem:[%s313 + $0x58] sm:$0xff]
        %v572 = vld [vmem:[%s313 + $0x60] sm:$0xff]
        %v573 = vld [vmem:[%s313 + $0x68] sm:$0xff]
        %v574 = vld [vmem:[%s313 + $0x70] sm:$0xff]
        %v575 = vld [vmem:[%s313 + $0x78] sm:$0xff]
        %v576 = vld [vmem:[%s313 + $0x80] sm:$0xff]
        %v577 = vld [vmem:[%s313 + $0x88] sm:$0xff]
        %v578 = vld [vmem:[%s313 + $0x90] sm:$0xff]
        %v579 = vld [vmem:[%s313 + $0x98] sm:$0xff]
        %v580 = vld [vmem:[%s313 + $0xa0] sm:$0xff]
        %v581 = vld [vmem:[%s313 + $0xa8] sm:$0xff]
        %v582 = vld [vmem:[%s313 + $0xb0] sm:$0xff]
        %v583 = vld [vmem:[%s313 + $0xb8] sm:$0xff]
        %v584 = vld [vmem:[%s313 + $0xc0] sm:$0xff]
        %v585 = vld [vmem:[%s313 + $0xc8] sm:$0xff]
        %v586 = vld [vmem:[%s313 + $0xd0] sm:$0xff]
        %v587 = vld [vmem:[%s313 + $0xd8] sm:$0xff]
        %v588 = vld [vmem:[%s313 + $0xe0] sm:$0xff]
        %v589 = vld [vmem:[%s313 + $0xe8] sm:$0xff]
        %v590 = vld [vmem:[%s313 + $0xf0] sm:$0xff]
        %v591 = vld [vmem:[%s313 + $0xf8] sm:$0xff]
        %v592 = vld [vmem:[%s313 + $0x100] sm:$0xff]
        %v593 = vld [vmem:[%s313 + $0x108] sm:$0xff]
        %v594 = vld [vmem:[%s313 + $0x110] sm:$0xff]
        %v595 = vld [vmem:[%s313 + $0x118] sm:$0xff]
        %v596 = vld [vmem:[%s313 + $0x120] sm:$0xff]
        %v597 = vld [vmem:[%s313 + $0x128] sm:$0xff]
        %v598 = vld [vmem:[%s313 + $0x130] sm:$0xff]
        %v599 = vld [vmem:[%s313 + $0x138] sm:$0xff]
        %v600 = vld [vmem:[%s313 + $0x140] sm:$0xff]
        %v601 = vld [vmem:[%s313 + $0x148] sm:$0xff]
        %v602 = vld [vmem:[%s313 + $0x150] sm:$0xff]
        %v603 = vld [vmem:[%s313 + $0x158] sm:$0xff]
        %v604 = vld [vmem:[%s313 + $0x160] sm:$0xff]
        %v605 = vld [vmem:[%s313 + $0x168] sm:$0xff]
        %v606 = vld [vmem:[%s313 + $0x170] sm:$0xff]
        %v607 = vld [vmem:[%s313 + $0x178] sm:$0xff]
        %v608 = vld [vmem:[%s313 + $0x180] sm:$0xff]
        %v609 = vld [vmem:[%s313 + $0x188] sm:$0xff]
        %v610 = vld [vmem:[%s313 + $0x190] sm:$0xff]
        %v611 = vld [vmem:[%s313 + $0x198] sm:$0xff]
        %v612 = vld [vmem:[%s313 + $0x1a0] sm:$0xff]
        %v613 = vld [vmem:[%s313 + $0x1a8] sm:$0xff]
        %v614 = vld [vmem:[%s313 + $0x1b0] sm:$0xff]
        %v615 = vld [vmem:[%s313 + $0x1b8] sm:$0xff]
        %v616 = vld [vmem:[%s313 + $0x1c0] sm:$0xff]
        %v617 = vld [vmem:[%s313 + $0x1c8] sm:$0xff]
        %v618 = vld [vmem:[%s313 + $0x1d0] sm:$0xff]
        %v619 = vld [vmem:[%s313 + $0x1d8] sm:$0xff]
        %v620 = vld [vmem:[%s313 + $0x1e0] sm:$0xff]
        %v621 = vld [vmem:[%s313 + $0x1e8] sm:$0xff]
        %v622 = vld [vmem:[%s313 + $0x1f0] sm:$0xff]
        %v623 = vld [vmem:[%s313 + $0x1f8] sm:$0xff]
        %624 = vmatprep.subr.mxu0 0.0
        %625 = vmatpush1.xpose.msra.mxu0 %v496
        %626 = vmatprep.subr.mxu0 0.0
        %627 = vmatpush1.xpose.msra.mxu0 %v497
        %628 = vmatprep.subr.mxu0 0.0
        %629 = vmatpush1.xpose.msra.mxu0 %v498
        %630 = vmatprep.subr.mxu0 0.0
        %631 = vmatpush1.xpose.msra.mxu0 %v499
        %632 = vmatprep.subr.mxu0 0.0
        %633 = vmatpush1.xpose.msra.mxu0 %v500
        %634 = vmatprep.subr.mxu0 0.0
        %635 = vmatpush1.xpose.msra.mxu0 %v501
        %636 = vmatprep.subr.mxu0 0.0
        %637 = vmatpush1.xpose.msra.mxu0 %v502
        %638 = vmatprep.subr.mxu0 0.0
        %639 = vmatpush1.xpose.msra.mxu0 %v503
        %640 = vmatprep.subr.mxu0 0.0
        %641 = vmatpush1.xpose.msra.mxu0 %v504
        %642 = vmatprep.subr.mxu0 0.0
        %643 = vmatpush1.xpose.msra.mxu0 %v505
        %644 = vmatprep.subr.mxu0 0.0
        %645 = vmatpush1.xpose.msra.mxu0 %v506
        %646 = vmatprep.subr.mxu0 0.0
        %647 = vmatpush1.xpose.msra.mxu0 %v507
        %648 = vmatprep.subr.mxu0 0.0
        %649 = vmatpush1.xpose.msra.mxu0 %v508
        %650 = vmatprep.subr.mxu0 0.0
        %651 = vmatpush1.xpose.msra.mxu0 %v509
        %652 = vmatprep.subr.mxu0 0.0
        %653 = vmatpush1.xpose.msra.mxu0 %v510
        %654 = vmatprep.subr.mxu0 0.0
        %655 = vmatpush1.xpose.msra.mxu0 %v511
        %656 = vmatprep.subr.mxu0 0.0
        %657 = vmatpush1.xpose.msra.mxu0 0.0
        %658 = vmatprep.subr.mxu0 0.0
        %659 = vmatpush1.xpose.msra.mxu0 0.0
        %660 = vmatprep.subr.mxu0 0.0
        %661 = vmatpush1.xpose.msra.mxu0 0.0
        %662 = vmatprep.subr.mxu0 0.0
        %663 = vmatpush1.xpose.msra.mxu0 0.0
        %664 = vmatprep.subr.mxu0 0.0
        %665 = vmatpush1.xpose.msra.mxu0 0.0
        %666 = vmatprep.subr.mxu0 0.0
        %667 = vmatpush1.xpose.msra.mxu0 0.0
        %668 = vmatprep.subr.mxu0 0.0
        %669 = vmatpush1.xpose.msra.mxu0 0.0
        %670 = vmatprep.subr.mxu0 0.0
        %671 = vmatpush1.xpose.msra.mxu0 0.0
        %672 = vmatprep.subr.mxu0 0.0
        %673 = vmatpush1.xpose.msra.mxu0 0.0
        %674 = vmatprep.subr.mxu0 0.0
        %675 = vmatpush1.xpose.msra.mxu0 0.0
        %676 = vmatprep.subr.mxu0 0.0
        %677 = vmatpush1.xpose.msra.mxu0 0.0
        %678 = vmatprep.subr.mxu0 0.0
        %679 = vmatpush1.xpose.msra.mxu0 0.0
        %680 = vmatprep.subr.mxu0 0.0
        %681 = vmatpush1.xpose.msra.mxu0 0.0
        %682 = vmatprep.subr.mxu0 0.0
        %683 = vmatpush1.xpose.msra.mxu0 0.0
        %684 = vmatprep.subr.mxu0 0.0
        %685 = vmatpush1.xpose.msra.mxu0 0.0
        %686 = vmatprep.subr.mxu0 0.0
        %687 = vmatpush1.xpose.msra.mxu0 0.0
        %688 = vmatprep.mubr.f32.mxu0 0.0
        %689 = vmatmul.mubr.f32.gmra.mrb[0].mxu0 %v432
        %v690 = vpop.f32.mrb[0].mxu0
        %v691 = vadd.f32 0.0, %v690
        %v692 = vpop.f32.mrb[0].mxu0
        %693 = vmatprep.mubr.f32.mxu0 0.0
        %694 = vmatmul.mubr.f32.gmra.mrb[0].mxu0 %v433
        %v695 = vpop.f32.mrb[0].mxu0
        %v696 = vadd.f32 0.0, %v695
        %v697 = vpop.f32.mrb[0].mxu0
        %698 = vmatprep.mubr.f32.mxu0 0.0
        %699 = vmatmul.mubr.f32.gmra.mrb[0].mxu0 %v434
        %v700 = vpop.f32.mrb[0].mxu0
        %v701 = vadd.f32 0.0, %v700
        %v702 = vpop.f32.mrb[0].mxu0
        %703 = vmatprep.mubr.f32.mxu0 0.0
        %704 = vmatmul.mubr.f32.gmra.mrb[0].mxu0 %v435
        %v705 = vpop.f32.mrb[0].mxu0
        %v706 = vadd.f32 0.0, %v705
        %v707 = vpop.f32.mrb[0].mxu0
        %708 = vmatprep.mubr.f32.mxu0 0.0
        %709 = vmatmul.mubr.f32.gmra.mrb[0].mxu0 %v436
        %v710 = vpop.f32.mrb[0].mxu0
        %v711 = vadd.f32 0.0, %v710
        %v712 = vpop.f32.mrb[0].mxu0
        %713 = vmatprep.mubr.f32.mxu0 0.0
        %714 = vmatmul.mubr.f32.gmra.mrb[0].mxu0 %v437
        %v715 = vpop.f32.mrb[0].mxu0
        %v716 = vadd.f32 0.0, %v715
        %v717 = vpop.f32.mrb[0].mxu0
        %718 = vmatprep.mubr.f32.mxu0 0.0
        %719 = vmatmul.mubr.f32.gmra.mrb[0].mxu0 %v438
        %v720 = vpop.f32.mrb[0].mxu0
        %v721 = vadd.f32 0.0, %v720
        %v722 = vpop.f32.mrb[0].mxu0
        %723 = vmatprep.mubr.f32.mxu0 0.0
        %724 = vmatmul.mubr.f32.gmra.mrb[0].mxu0 %v439
        %v725 = vpop.f32.mrb[0].mxu0
        %v726 = vadd.f32 0.0, %v725
        %v727 = vpop.f32.mrb[0].mxu0
        %728 = vmatprep.mubr.f32.mxu0 0.0
        %729 = vmatmul.mubr.f32.gmra.mrb[0].mxu0 %v440
        %v730 = vpop.f32.mrb[0].mxu0
        %v731 = vadd.f32 0.0, %v730
        %v732 = vpop.f32.mrb[0].mxu0
        %733 = vmatprep.mubr.f32.mxu0 0.0
        %734 = vmatmul.mubr.f32.gmra.mrb[0].mxu0 %v441
        %v735 = vpop.f32.mrb[0].mxu0
        %v736 = vadd.f32 0.0, %v735
        %v737 = vpop.f32.mrb[0].mxu0
        %738 = vmatprep.mubr.f32.mxu0 0.0
        %739 = vmatmul.mubr.f32.gmra.mrb[0].mxu0 %v442
        %v740 = vpop.f32.mrb[0].mxu0
        %v741 = vadd.f32 0.0, %v740
        %v742 = vpop.f32.mrb[0].mxu0
        %743 = vmatprep.mubr.f32.mxu0 0.0
        %744 = vmatmul.mubr.f32.gmra.mrb[0].mxu0 %v443
        %v745 = vpop.f32.mrb[0].mxu0
        %v746 = vadd.f32 0.0, %v745
        %v747 = vpop.f32.mrb[0].mxu0
        %748 = vmatprep.mubr.f32.mxu0 0.0
        %749 = vmatmul.mubr.f32.gmra.mrb[0].mxu0 %v444
        %v750 = vpop.f32.mrb[0].mxu0
        %v751 = vadd.f32 0.0, %v750
        %v752 = vpop.f32.mrb[0].mxu0
        %753 = vmatprep.mubr.f32.mxu0 0.0
        %754 = vmatmul.mubr.f32.gmra.mrb[0].mxu0 %v445
        %v755 = vpop.f32.mrb[0].mxu0
        %v756 = vadd.f32 0.0, %v755
        %v757 = vpop.f32.mrb[0].mxu0
        %758 = vmatprep.mubr.f32.mxu0 0.0
        %759 = vmatmul.mubr.f32.gmra.mrb[0].mxu0 %v446
        %v760 = vpop.f32.mrb[0].mxu0
        %v761 = vadd.f32 0.0, %v760
        %v762 = vpop.f32.mrb[0].mxu0
        %763 = vmatprep.mubr.f32.mxu0 0.0
        %764 = vmatmul.mubr.f32.gmra.mrb[0].mxu0 %v447
        %v765 = vpop.f32.mrb[0].mxu0
        %v766 = vadd.f32 0.0, %v765
        %v767 = vpop.f32.mrb[0].mxu0
        %768 = vdwg.mxu0
        %769 = vmatprep.subr.mxu0 0.0
        %770 = vmatpush1.xpose.msra.mxu0 %v512
        %771 = vmatprep.subr.mxu0 0.0
        %772 = vmatpush1.xpose.msra.mxu0 %v513
        %773 = vmatprep.subr.mxu0 0.0
        %774 = vmatpush1.xpose.msra.mxu0 %v514
        %775 = vmatprep.subr.mxu0 0.0
        %776 = vmatpush1.xpose.msra.mxu0 %v515
        %777 = vmatprep.subr.mxu0 0.0
        %778 = vmatpush1.xpose.msra.mxu0 %v516
        %779 = vmatprep.subr.mxu0 0.0
        %780 = vmatpush1.xpose.msra.mxu0 %v517
        %781 = vmatprep.subr.mxu0 0.0
        %782 = vmatpush1.xpose.msra.mxu0 %v518
        %783 = vmatprep.subr.mxu0 0.0
        %784 = vmatpush1.xpose.msra.mxu0 %v519
        %785 = vmatprep.subr.mxu0 0.0
        %786 = vmatpush1.xpose.msra.mxu0 %v520
        %787 = vmatprep.subr.mxu0 0.0
        %788 = vmatpush1.xpose.msra.mxu0 %v521
        %789 = vmatprep.subr.mxu0 0.0
        %790 = vmatpush1.xpose.msra.mxu0 %v522
        %791 = vmatprep.subr.mxu0 0.0
        %792 = vmatpush1.xpose.msra.mxu0 %v523
        %793 = vmatprep.subr.mxu0 0.0
        %794 = vmatpush1.xpose.msra.mxu0 %v524
        %795 = vmatprep.subr.mxu0 0.0
        %796 = vmatpush1.xpose.msra.mxu0 %v525
        %797 = vmatprep.subr.mxu0 0.0
        %798 = vmatpush1.xpose.msra.mxu0 %v526
        %799 = vmatprep.subr.mxu0 0.0
        %800 = vmatpush1.xpose.msra.mxu0 %v527
        %801 = vmatprep.subr.mxu0 0.0
        %802 = vmatpush1.xpose.msra.mxu0 0.0
        %803 = vmatprep.subr.mxu0 0.0
        %804 = vmatpush1.xpose.msra.mxu0 0.0
        %805 = vmatprep.subr.mxu0 0.0
        %806 = vmatpush1.xpose.msra.mxu0 0.0
        %807 = vmatprep.subr.mxu0 0.0
        %808 = vmatpush1.xpose.msra.mxu0 0.0
        %809 = vmatprep.subr.mxu0 0.0
        %810 = vmatpush1.xpose.msra.mxu0 0.0
        %811 = vmatprep.subr.mxu0 0.0
        %812 = vmatpush1.xpose.msra.mxu0 0.0
        %813 = vmatprep.subr.mxu0 0.0
        %814 = vmatpush1.xpose.msra.mxu0 0.0
        %815 = vmatprep.subr.mxu0 0.0
        %816 = vmatpush1.xpose.msra.mxu0 0.0
        %817 = vmatprep.subr.mxu0 0.0
        %818 = vmatpush1.xpose.msra.mxu0 0.0
        %819 = vmatprep.subr.mxu0 0.0
        %820 = vmatpush1.xpose.msra.mxu0 0.0
        %821 = vmatprep.subr.mxu0 0.0
        %822 = vmatpush1.xpose.msra.mxu0 0.0
        %823 = vmatprep.subr.mxu0 0.0
        %824 = vmatpush1.xpose.msra.mxu0 0.0
        %825 = vmatprep.subr.mxu0 0.0
        %826 = vmatpush1.xpose.msra.mxu0 0.0
        %827 = vmatprep.subr.mxu0 0.0
        %828 = vmatpush1.xpose.msra.mxu0 0.0
        %829 = vmatprep.subr.mxu0 0.0
        %830 = vmatpush1.xpose.msra.mxu0 0.0
        %831 = vmatprep.subr.mxu0 0.0
        %832 = vmatpush1.xpose.msra.mxu0 0.0
        %833 = vmatprep.mubr.f32.mxu0 0.0
        %834 = vmatmul.mubr.f32.gmra.mrb[0].mxu0 %v448
        %v835 = vpop.f32.mrb[0].mxu0
        %v836 = vadd.f32 0.0, %v835
        %v837 = vpop.f32.mrb[0].mxu0
        %838 = vmatprep.mubr.f32.mxu0 0.0
        %839 = vmatmul.mubr.f32.gmra.mrb[0].mxu0 %v449
        %v840 = vpop.f32.mrb[0].mxu0
        %v841 = vadd.f32 0.0, %v840
        %v842 = vpop.f32.mrb[0].mxu0
        %843 = vmatprep.mubr.f32.mxu0 0.0
        %844 = vmatmul.mubr.f32.gmra.mrb[0].mxu0 %v450
        %v845 = vpop.f32.mrb[0].mxu0
        %v846 = vadd.f32 0.0, %v845
        %v847 = vpop.f32.mrb[0].mxu0
        %848 = vmatprep.mubr.f32.mxu0 0.0
        %849 = vmatmul.mubr.f32.gmra.mrb[0].mxu0 %v451
        %v850 = vpop.f32.mrb[0].mxu0
        %v851 = vadd.f32 0.0, %v850
        %v852 = vpop.f32.mrb[0].mxu0
        %853 = vmatprep.mubr.f32.mxu0 0.0
        %854 = vmatmul.mubr.f32.gmra.mrb[0].mxu0 %v452
        %v855 = vpop.f32.mrb[0].mxu0
        %v856 = vadd.f32 0.0, %v855
        %v857 = vpop.f32.mrb[0].mxu0
        %858 = vmatprep.mubr.f32.mxu0 0.0
        %859 = vmatmul.mubr.f32.gmra.mrb[0].mxu0 %v453
        %v860 = vpop.f32.mrb[0].mxu0
        %v861 = vadd.f32 0.0, %v860
        %v862 = vpop.f32.mrb[0].mxu0
        %863 = vmatprep.mubr.f32.mxu0 0.0
        %864 = vmatmul.mubr.f32.gmra.mrb[0].mxu0 %v454
        %v865 = vpop.f32.mrb[0].mxu0
        %v866 = vadd.f32 0.0, %v865
        %v867 = vpop.f32.mrb[0].mxu0
        %868 = vmatprep.mubr.f32.mxu0 0.0
        %869 = vmatmul.mubr.f32.gmra.mrb[0].mxu0 %v455
        %v870 = vpop.f32.mrb[0].mxu0
        %v871 = vadd.f32 0.0, %v870
        %v872 = vpop.f32.mrb[0].mxu0
        %873 = vmatprep.mubr.f32.mxu0 0.0
        %874 = vmatmul.mubr.f32.gmra.mrb[0].mxu0 %v456
        %v875 = vpop.f32.mrb[0].mxu0
        %v876 = vadd.f32 0.0, %v875
        %v877 = vpop.f32.mrb[0].mxu0
        %878 = vmatprep.mubr.f32.mxu0 0.0
        %879 = vmatmul.mubr.f32.gmra.mrb[0].mxu0 %v457
        %v880 = vpop.f32.mrb[0].mxu0
        %v881 = vadd.f32 0.0, %v880
        %v882 = vpop.f32.mrb[0].mxu0
        %883 = vmatprep.mubr.f32.mxu0 0.0
        %884 = vmatmul.mubr.f32.gmra.mrb[0].mxu0 %v458
        %v885 = vpop.f32.mrb[0].mxu0
        %v886 = vadd.f32 0.0, %v885
        %v887 = vpop.f32.mrb[0].mxu0
        %888 = vmatprep.mubr.f32.mxu0 0.0
        %889 = vmatmul.mubr.f32.gmra.mrb[0].mxu0 %v459
        %v890 = vpop.f32.mrb[0].mxu0
        %v891 = vadd.f32 0.0, %v890
        %v892 = vpop.f32.mrb[0].mxu0
        %893 = vmatprep.mubr.f32.mxu0 0.0
        %894 = vmatmul.mubr.f32.gmra.mrb[0].mxu0 %v460
        %v895 = vpop.f32.mrb[0].mxu0
        %v896 = vadd.f32 0.0, %v895
        %v897 = vpop.f32.mrb[0].mxu0
        %898 = vmatprep.mubr.f32.mxu0 0.0
        %899 = vmatmul.mubr.f32.gmra.mrb[0].mxu0 %v461
        %v900 = vpop.f32.mrb[0].mxu0
        %v901 = vadd.f32 0.0, %v900
        %v902 = vpop.f32.mrb[0].mxu0
        %903 = vmatprep.mubr.f32.mxu0 0.0
        %904 = vmatmul.mubr.f32.gmra.mrb[0].mxu0 %v462
        %v905 = vpop.f32.mrb[0].mxu0
        %v906 = vadd.f32 0.0, %v905
        %v907 = vpop.f32.mrb[0].mxu0
        %908 = vmatprep.mubr.f32.mxu0 0.0
        %909 = vmatmul.mubr.f32.gmra.mrb[0].mxu0 %v463
        %v910 = vpop.f32.mrb[0].mxu0
        %v911 = vadd.f32 0.0, %v910
        %v912 = vpop.f32.mrb[0].mxu0
        %913 = vdwg.mxu0
        %914 = vmatprep.subr.mxu0 0.0
        %915 = vmatpush1.xpose.msra.mxu0 %v528
        %916 = vmatprep.subr.mxu0 0.0
        %917 = vmatpush1.xpose.msra.mxu0 %v529
        %918 = vmatprep.subr.mxu0 0.0
        %919 = vmatpush1.xpose.msra.mxu0 %v530
        %920 = vmatprep.subr.mxu0 0.0
        %921 = vmatpush1.xpose.msra.mxu0 %v531
        %922 = vmatprep.subr.mxu0 0.0
        %923 = vmatpush1.xpose.msra.mxu0 %v532
        %924 = vmatprep.subr.mxu0 0.0
        %925 = vmatpush1.xpose.msra.mxu0 %v533
        %926 = vmatprep.subr.mxu0 0.0
        %927 = vmatpush1.xpose.msra.mxu0 %v534
        %928 = vmatprep.subr.mxu0 0.0
        %929 = vmatpush1.xpose.msra.mxu0 %v535
        %930 = vmatprep.subr.mxu0 0.0
        %931 = vmatpush1.xpose.msra.mxu0 %v536
        %932 = vmatprep.subr.mxu0 0.0
        %933 = vmatpush1.xpose.msra.mxu0 %v537
        %934 = vmatprep.subr.mxu0 0.0
        %935 = vmatpush1.xpose.msra.mxu0 %v538
        %936 = vmatprep.subr.mxu0 0.0
        %937 = vmatpush1.xpose.msra.mxu0 %v539
        %938 = vmatprep.subr.mxu0 0.0
        %939 = vmatpush1.xpose.msra.mxu0 %v540
        %940 = vmatprep.subr.mxu0 0.0
        %941 = vmatpush1.xpose.msra.mxu0 %v541
        %942 = vmatprep.subr.mxu0 0.0
        %943 = vmatpush1.xpose.msra.mxu0 %v542
        %944 = vmatprep.subr.mxu0 0.0
        %945 = vmatpush1.xpose.msra.mxu0 %v543
        %946 = vmatprep.subr.mxu0 0.0
        %947 = vmatpush1.xpose.msra.mxu0 0.0
        %948 = vmatprep.subr.mxu0 0.0
        %949 = vmatpush1.xpose.msra.mxu0 0.0
        %950 = vmatprep.subr.mxu0 0.0
        %951 = vmatpush1.xpose.msra.mxu0 0.0
        %952 = vmatprep.subr.mxu0 0.0
        %953 = vmatpush1.xpose.msra.mxu0 0.0
        %954 = vmatprep.subr.mxu0 0.0
        %955 = vmatpush1.xpose.msra.mxu0 0.0
        %956 = vmatprep.subr.mxu0 0.0
        %957 = vmatpush1.xpose.msra.mxu0 0.0
        %958 = vmatprep.subr.mxu0 0.0
        %959 = vmatpush1.xpose.msra.mxu0 0.0
        %960 = vmatprep.subr.mxu0 0.0
        %961 = vmatpush1.xpose.msra.mxu0 0.0
        %962 = vmatprep.subr.mxu0 0.0
        %963 = vmatpush1.xpose.msra.mxu0 0.0
        %964 = vmatprep.subr.mxu0 0.0
        %965 = vmatpush1.xpose.msra.mxu0 0.0
        %966 = vmatprep.subr.mxu0 0.0
        %967 = vmatpush1.xpose.msra.mxu0 0.0
        %968 = vmatprep.subr.mxu0 0.0
        %969 = vmatpush1.xpose.msra.mxu0 0.0
        %970 = vmatprep.subr.mxu0 0.0
        %971 = vmatpush1.xpose.msra.mxu0 0.0
        %972 = vmatprep.subr.mxu0 0.0
        %973 = vmatpush1.xpose.msra.mxu0 0.0
        %974 = vmatprep.subr.mxu0 0.0
        %975 = vmatpush1.xpose.msra.mxu0 0.0
        %976 = vmatprep.subr.mxu0 0.0
        %977 = vmatpush1.xpose.msra.mxu0 0.0
        %978 = vmatprep.mubr.f32.mxu0 0.0
        %979 = vmatmul.mubr.f32.gmra.mrb[0].mxu0 %v464
        %v980 = vpop.f32.mrb[0].mxu0
        %v981 = vadd.f32 0.0, %v980
        %v982 = vpop.f32.mrb[0].mxu0
        %983 = vmatprep.mubr.f32.mxu0 0.0
        %984 = vmatmul.mubr.f32.gmra.mrb[0].mxu0 %v465
        %v985 = vpop.f32.mrb[0].mxu0
        %v986 = vadd.f32 0.0, %v985
        %v987 = vpop.f32.mrb[0].mxu0
        %988 = vmatprep.mubr.f32.mxu0 0.0
        %989 = vmatmul.mubr.f32.gmra.mrb[0].mxu0 %v466
        %v990 = vpop.f32.mrb[0].mxu0
        %v991 = vadd.f32 0.0, %v990
        %v992 = vpop.f32.mrb[0].mxu0
        %993 = vmatprep.mubr.f32.mxu0 0.0
        %994 = vmatmul.mubr.f32.gmra.mrb[0].mxu0 %v467
        %v995 = vpop.f32.mrb[0].mxu0
        %v996 = vadd.f32 0.0, %v995
        %v997 = vpop.f32.mrb[0].mxu0
        %998 = vmatprep.mubr.f32.mxu0 0.0
        %999 = vmatmul.mubr.f32.gmra.mrb[0].mxu0 %v468
        %v1000 = vpop.f32.mrb[0].mxu0
        %v1001 = vadd.f32 0.0, %v1000
        %v1002 = vpop.f32.mrb[0].mxu0
        %1003 = vmatprep.mubr.f32.mxu0 0.0
        %1004 = vmatmul.mubr.f32.gmra.mrb[0].mxu0 %v469
        %v1005 = vpop.f32.mrb[0].mxu0
        %v1006 = vadd.f32 0.0, %v1005
        %v1007 = vpop.f32.mrb[0].mxu0
        %1008 = vmatprep.mubr.f32.mxu0 0.0
        %1009 = vmatmul.mubr.f32.gmra.mrb[0].mxu0 %v470
        %v1010 = vpop.f32.mrb[0].mxu0
        %v1011 = vadd.f32 0.0, %v1010
        %v1012 = vpop.f32.mrb[0].mxu0
        %1013 = vmatprep.mubr.f32.mxu0 0.0
        %1014 = vmatmul.mubr.f32.gmra.mrb[0].mxu0 %v471
        %v1015 = vpop.f32.mrb[0].mxu0
        %v1016 = vadd.f32 0.0, %v1015
        %v1017 = vpop.f32.mrb[0].mxu0
        %1018 = vmatprep.mubr.f32.mxu0 0.0
        %1019 = vmatmul.mubr.f32.gmra.mrb[0].mxu0 %v472
        %v1020 = vpop.f32.mrb[0].mxu0
        %v1021 = vadd.f32 0.0, %v1020
        %v1022 = vpop.f32.mrb[0].mxu0
        %1023 = vmatprep.mubr.f32.mxu0 0.0
        %1024 = vmatmul.mubr.f32.gmra.mrb[0].mxu0 %v473
        %v1025 = vpop.f32.mrb[0].mxu0
        %v1026 = vadd.f32 0.0, %v1025
        %v1027 = vpop.f32.mrb[0].mxu0
        %1028 = vmatprep.mubr.f32.mxu0 0.0
        %1029 = vmatmul.mubr.f32.gmra.mrb[0].mxu0 %v474
        %v1030 = vpop.f32.mrb[0].mxu0
        %v1031 = vadd.f32 0.0, %v1030
        %v1032 = vpop.f32.mrb[0].mxu0
        %1033 = vmatprep.mubr.f32.mxu0 0.0
        %1034 = vmatmul.mubr.f32.gmra.mrb[0].mxu0 %v475
        %v1035 = vpop.f32.mrb[0].mxu0
        %v1036 = vadd.f32 0.0, %v1035
        %v1037 = vpop.f32.mrb[0].mxu0
        %1038 = vmatprep.mubr.f32.mxu0 0.0
        %1039 = vmatmul.mubr.f32.gmra.mrb[0].mxu0 %v476
        %v1040 = vpop.f32.mrb[0].mxu0
        %v1041 = vadd.f32 0.0, %v1040
        %v1042 = vpop.f32.mrb[0].mxu0
        %1043 = vmatprep.mubr.f32.mxu0 0.0
        %1044 = vmatmul.mubr.f32.gmra.mrb[0].mxu0 %v477
        %v1045 = vpop.f32.mrb[0].mxu0
        %v1046 = vadd.f32 0.0, %v1045
        %v1047 = vpop.f32.mrb[0].mxu0
        %1048 = vmatprep.mubr.f32.mxu0 0.0
        %1049 = vmatmul.mubr.f32.gmra.mrb[0].mxu0 %v478
        %v1050 = vpop.f32.mrb[0].mxu0
        %v1051 = vadd.f32 0.0, %v1050
        %v1052 = vpop.f32.mrb[0].mxu0
        %1053 = vmatprep.mubr.f32.mxu0 0.0
        %1054 = vmatmul.mubr.f32.gmra.mrb[0].mxu0 %v479
        %v1055 = vpop.f32.mrb[0].mxu0
        %v1056 = vadd.f32 0.0, %v1055
        %v1057 = vpop.f32.mrb[0].mxu0
        %1058 = vdwg.mxu0
        %1059 = vmatprep.subr.mxu0 0.0
        %1060 = vmatpush1.xpose.msra.mxu0 %v544
        %1061 = vmatprep.subr.mxu0 0.0
        %1062 = vmatpush1.xpose.msra.mxu0 %v545
        %1063 = vmatprep.subr.mxu0 0.0
        %1064 = vmatpush1.xpose.msra.mxu0 %v546
        %1065 = vmatprep.subr.mxu0 0.0
        %1066 = vmatpush1.xpose.msra.mxu0 %v547
        %1067 = vmatprep.subr.mxu0 0.0
        %1068 = vmatpush1.xpose.msra.mxu0 %v548
        %1069 = vmatprep.subr.mxu0 0.0
        %1070 = vmatpush1.xpose.msra.mxu0 %v549
        %1071 = vmatprep.subr.mxu0 0.0
        %1072 = vmatpush1.xpose.msra.mxu0 %v550
        %1073 = vmatprep.subr.mxu0 0.0
        %1074 = vmatpush1.xpose.msra.mxu0 %v551
        %1075 = vmatprep.subr.mxu0 0.0
        %1076 = vmatpush1.xpose.msra.mxu0 %v552
        %1077 = vmatprep.subr.mxu0 0.0
        %1078 = vmatpush1.xpose.msra.mxu0 %v553
        %1079 = vmatprep.subr.mxu0 0.0
        %1080 = vmatpush1.xpose.msra.mxu0 %v554
        %1081 = vmatprep.subr.mxu0 0.0
        %1082 = vmatpush1.xpose.msra.mxu0 %v555
        %1083 = vmatprep.subr.mxu0 0.0
        %1084 = vmatpush1.xpose.msra.mxu0 %v556
        %1085 = vmatprep.subr.mxu0 0.0
        %1086 = vmatpush1.xpose.msra.mxu0 %v557
        %1087 = vmatprep.subr.mxu0 0.0
        %1088 = vmatpush1.xpose.msra.mxu0 %v558
        %1089 = vmatprep.subr.mxu0 0.0
        %1090 = vmatpush1.xpose.msra.mxu0 %v559
        %1091 = vmatprep.subr.mxu0 0.0
        %1092 = vmatpush1.xpose.msra.mxu0 0.0
        %1093 = vmatprep.subr.mxu0 0.0
        %1094 = vmatpush1.xpose.msra.mxu0 0.0
        %1095 = vmatprep.subr.mxu0 0.0
        %1096 = vmatpush1.xpose.msra.mxu0 0.0
        %1097 = vmatprep.subr.mxu0 0.0
        %1098 = vmatpush1.xpose.msra.mxu0 0.0
        %1099 = vmatprep.subr.mxu0 0.0
        %1100 = vmatpush1.xpose.msra.mxu0 0.0
        %1101 = vmatprep.subr.mxu0 0.0
        %1102 = vmatpush1.xpose.msra.mxu0 0.0
        %1103 = vmatprep.subr.mxu0 0.0
        %1104 = vmatpush1.xpose.msra.mxu0 0.0
        %1105 = vmatprep.subr.mxu0 0.0
        %1106 = vmatpush1.xpose.msra.mxu0 0.0
        %1107 = vmatprep.subr.mxu0 0.0
        %1108 = vmatpush1.xpose.msra.mxu0 0.0
        %1109 = vmatprep.subr.mxu0 0.0
        %1110 = vmatpush1.xpose.msra.mxu0 0.0
        %1111 = vmatprep.subr.mxu0 0.0
        %1112 = vmatpush1.xpose.msra.mxu0 0.0
        %1113 = vmatprep.subr.mxu0 0.0
        %1114 = vmatpush1.xpose.msra.mxu0 0.0
        %1115 = vmatprep.subr.mxu0 0.0
        %1116 = vmatpush1.xpose.msra.mxu0 0.0
        %1117 = vmatprep.subr.mxu0 0.0
        %1118 = vmatpush1.xpose.msra.mxu0 0.0
        %1119 = vmatprep.subr.mxu0 0.0
        %1120 = vmatpush1.xpose.msra.mxu0 0.0
        %1121 = vmatprep.subr.mxu0 0.0
        %1122 = vmatpush1.xpose.msra.mxu0 0.0
        %1123 = vmatprep.mubr.f32.mxu0 0.0
        %1124 = vmatmul.mubr.f32.gmra.mrb[0].mxu0 %v480
        %v1125 = vpop.f32.mrb[0].mxu0
        %v1126 = vadd.f32 0.0, %v1125
        %v1127 = vpop.f32.mrb[0].mxu0
        %1128 = vmatprep.mubr.f32.mxu0 0.0
        %1129 = vmatmul.mubr.f32.gmra.mrb[0].mxu0 %v481
        %v1130 = vpop.f32.mrb[0].mxu0
        %v1131 = vadd.f32 0.0, %v1130
        %v1132 = vpop.f32.mrb[0].mxu0
        %1133 = vmatprep.mubr.f32.mxu0 0.0
        %1134 = vmatmul.mubr.f32.gmra.mrb[0].mxu0 %v482
        %v1135 = vpop.f32.mrb[0].mxu0
        %v1136 = vadd.f32 0.0, %v1135
        %v1137 = vpop.f32.mrb[0].mxu0
        %1138 = vmatprep.mubr.f32.mxu0 0.0
        %1139 = vmatmul.mubr.f32.gmra.mrb[0].mxu0 %v483
        %v1140 = vpop.f32.mrb[0].mxu0
        %v1141 = vadd.f32 0.0, %v1140
        %v1142 = vpop.f32.mrb[0].mxu0
        %1143 = vmatprep.mubr.f32.mxu0 0.0
        %1144 = vmatmul.mubr.f32.gmra.mrb[0].mxu0 %v484
        %v1145 = vpop.f32.mrb[0].mxu0
        %v1146 = vadd.f32 0.0, %v1145
        %v1147 = vpop.f32.mrb[0].mxu0
        %1148 = vmatprep.mubr.f32.mxu0 0.0
        %1149 = vmatmul.mubr.f32.gmra.mrb[0].mxu0 %v485
        %v1150 = vpop.f32.mrb[0].mxu0
        %v1151 = vadd.f32 0.0, %v1150
        %v1152 = vpop.f32.mrb[0].mxu0
        %1153 = vmatprep.mubr.f32.mxu0 0.0
        %1154 = vmatmul.mubr.f32.gmra.mrb[0].mxu0 %v486
        %v1155 = vpop.f32.mrb[0].mxu0
        %v1156 = vadd.f32 0.0, %v1155
        %v1157 = vpop.f32.mrb[0].mxu0
        %1158 = vmatprep.mubr.f32.mxu0 0.0
        %1159 = vmatmul.mubr.f32.gmra.mrb[0].mxu0 %v487
        %v1160 = vpop.f32.mrb[0].mxu0
        %v1161 = vadd.f32 0.0, %v1160
        %v1162 = vpop.f32.mrb[0].mxu0
        %1163 = vmatprep.mubr.f32.mxu0 0.0
        %1164 = vmatmul.mubr.f32.gmra.mrb[0].mxu0 %v488
        %v1165 = vpop.f32.mrb[0].mxu0
        %v1166 = vadd.f32 0.0, %v1165
        %v1167 = vpop.f32.mrb[0].mxu0
        %1168 = vmatprep.mubr.f32.mxu0 0.0
        %1169 = vmatmul.mubr.f32.gmra.mrb[0].mxu0 %v489
        %v1170 = vpop.f32.mrb[0].mxu0
        %v1171 = vadd.f32 0.0, %v1170
        %v1172 = vpop.f32.mrb[0].mxu0
        %1173 = vmatprep.mubr.f32.mxu0 0.0
        %1174 = vmatmul.mubr.f32.gmra.mrb[0].mxu0 %v490
        %v1175 = vpop.f32.mrb[0].mxu0
        %v1176 = vadd.f32 0.0, %v1175
        %v1177 = vpop.f32.mrb[0].mxu0
        %1178 = vmatprep.mubr.f32.mxu0 0.0
        %1179 = vmatmul.mubr.f32.gmra.mrb[0].mxu0 %v491
        %v1180 = vpop.f32.mrb[0].mxu0
        %v1181 = vadd.f32 0.0, %v1180
        %v1182 = vpop.f32.mrb[0].mxu0
        %1183 = vmatprep.mubr.f32.mxu0 0.0
        %1184 = vmatmul.mubr.f32.gmra.mrb[0].mxu0 %v492
        %v1185 = vpop.f32.mrb[0].mxu0
        %v1186 = vadd.f32 0.0, %v1185
        %v1187 = vpop.f32.mrb[0].mxu0
        %1188 = vmatprep.mubr.f32.mxu0 0.0
        %1189 = vmatmul.mubr.f32.gmra.mrb[0].mxu0 %v493
        %v1190 = vpop.f32.mrb[0].mxu0
        %v1191 = vadd.f32 0.0, %v1190
        %v1192 = vpop.f32.mrb[0].mxu0
        %1193 = vmatprep.mubr.f32.mxu0 0.0
        %1194 = vmatmul.mubr.f32.gmra.mrb[0].mxu0 %v494
        %v1195 = vpop.f32.mrb[0].mxu0
        %v1196 = vadd.f32 0.0, %v1195
        %v1197 = vpop.f32.mrb[0].mxu0
        %1198 = vmatprep.mubr.f32.mxu0 0.0
        %1199 = vmatmul.mubr.f32.gmra.mrb[0].mxu0 %v495
        %v1200 = vpop.f32.mrb[0].mxu0
        %v1201 = vadd.f32 0.0, %v1200
        %v1202 = vpop.f32.mrb[0].mxu0
        %1203 = vdwg.mxu0
        %1204 = vmax.xlane.f32.xlu0 %v691
        %v1205 = vpop.xlane.xlu0 %1204
        %1206 = vmax.xlane.f32.xlu0 %v696
        %v1207 = vpop.xlane.xlu0 %1206
        %1208 = vmax.xlane.f32.xlu0 %v701
        %v1209 = vpop.xlane.xlu0 %1208
        %1210 = vmax.xlane.f32.xlu0 %v706
        %v1211 = vpop.xlane.xlu0 %1210
        %1212 = vmax.xlane.f32.xlu0 %v711
        %v1213 = vpop.xlane.xlu0 %1212
        %1214 = vmax.xlane.f32.xlu0 %v716
        %v1215 = vpop.xlane.xlu0 %1214
        %1216 = vmax.xlane.f32.xlu0 %v721
        %v1217 = vpop.xlane.xlu0 %1216
        %1218 = vmax.xlane.f32.xlu0 %v726
        %v1219 = vpop.xlane.xlu0 %1218
        %1220 = vmax.xlane.f32.xlu0 %v731
        %v1221 = vpop.xlane.xlu0 %1220
        %1222 = vmax.xlane.f32.xlu0 %v736
        %v1223 = vpop.xlane.xlu0 %1222
        %1224 = vmax.xlane.f32.xlu0 %v741
        %v1225 = vpop.xlane.xlu0 %1224
        %1226 = vmax.xlane.f32.xlu0 %v746
        %v1227 = vpop.xlane.xlu0 %1226
        %1228 = vmax.xlane.f32.xlu0 %v751
        %v1229 = vpop.xlane.xlu0 %1228
        %1230 = vmax.xlane.f32.xlu0 %v756
        %v1231 = vpop.xlane.xlu0 %1230
        %1232 = vmax.xlane.f32.xlu0 %v761
        %v1233 = vpop.xlane.xlu0 %1232
        %1234 = vmax.xlane.f32.xlu0 %v766
        %v1235 = vpop.xlane.xlu0 %1234
        %1236 = vmax.xlane.f32.xlu0 %v836
        %v1237 = vpop.xlane.xlu0 %1236
        %1238 = vmax.xlane.f32.xlu0 %v841
        %v1239 = vpop.xlane.xlu0 %1238
        %1240 = vmax.xlane.f32.xlu0 %v846
        %v1241 = vpop.xlane.xlu0 %1240
        %1242 = vmax.xlane.f32.xlu0 %v851
        %v1243 = vpop.xlane.xlu0 %1242
        %1244 = vmax.xlane.f32.xlu0 %v856
        %v1245 = vpop.xlane.xlu0 %1244
        %1246 = vmax.xlane.f32.xlu0 %v861
        %v1247 = vpop.xlane.xlu0 %1246
        %1248 = vmax.xlane.f32.xlu0 %v866
        %v1249 = vpop.xlane.xlu0 %1248
        %1250 = vmax.xlane.f32.xlu0 %v871
        %v1251 = vpop.xlane.xlu0 %1250
        %1252 = vmax.xlane.f32.xlu0 %v876
        %v1253 = vpop.xlane.xlu0 %1252
        %1254 = vmax.xlane.f32.xlu0 %v881
        %v1255 = vpop.xlane.xlu0 %1254
        %1256 = vmax.xlane.f32.xlu0 %v886
        %v1257 = vpop.xlane.xlu0 %1256
        %1258 = vmax.xlane.f32.xlu0 %v891
        %v1259 = vpop.xlane.xlu0 %1258
        %1260 = vmax.xlane.f32.xlu0 %v896
        %v1261 = vpop.xlane.xlu0 %1260
        %1262 = vmax.xlane.f32.xlu0 %v901
        %v1263 = vpop.xlane.xlu0 %1262
        %1264 = vmax.xlane.f32.xlu0 %v906
        %v1265 = vpop.xlane.xlu0 %1264
        %1266 = vmax.xlane.f32.xlu0 %v911
        %v1267 = vpop.xlane.xlu0 %1266
        %1268 = vmax.xlane.f32.xlu0 %v981
        %v1269 = vpop.xlane.xlu0 %1268
        %1270 = vmax.xlane.f32.xlu0 %v986
        %v1271 = vpop.xlane.xlu0 %1270
        %1272 = vmax.xlane.f32.xlu0 %v991
        %v1273 = vpop.xlane.xlu0 %1272
        %1274 = vmax.xlane.f32.xlu0 %v996
        %v1275 = vpop.xlane.xlu0 %1274
        %1276 = vmax.xlane.f32.xlu0 %v1001
        %v1277 = vpop.xlane.xlu0 %1276
        %1278 = vmax.xlane.f32.xlu0 %v1006
        %v1279 = vpop.xlane.xlu0 %1278
        %1280 = vmax.xlane.f32.xlu0 %v1011
        %v1281 = vpop.xlane.xlu0 %1280
        %1282 = vmax.xlane.f32.xlu0 %v1016
        %v1283 = vpop.xlane.xlu0 %1282
        %1284 = vmax.xlane.f32.xlu0 %v1021
        %v1285 = vpop.xlane.xlu0 %1284
        %1286 = vmax.xlane.f32.xlu0 %v1026
        %v1287 = vpop.xlane.xlu0 %1286
        %1288 = vmax.xlane.f32.xlu0 %v1031
        %v1289 = vpop.xlane.xlu0 %1288
        %1290 = vmax.xlane.f32.xlu0 %v1036
        %v1291 = vpop.xlane.xlu0 %1290
        %1292 = vmax.xlane.f32.xlu0 %v1041
        %v1293 = vpop.xlane.xlu0 %1292
        %1294 = vmax.xlane.f32.xlu0 %v1046
        %v1295 = vpop.xlane.xlu0 %1294
        %1296 = vmax.xlane.f32.xlu0 %v1051
        %v1297 = vpop.xlane.xlu0 %1296
        %1298 = vmax.xlane.f32.xlu0 %v1056
        %v1299 = vpop.xlane.xlu0 %1298
        %1300 = vmax.xlane.f32.xlu0 %v1126
        %v1301 = vpop.xlane.xlu0 %1300
        %1302 = vmax.xlane.f32.xlu0 %v1131
        %v1303 = vpop.xlane.xlu0 %1302
        %1304 = vmax.xlane.f32.xlu0 %v1136
        %v1305 = vpop.xlane.xlu0 %1304
        %1306 = vmax.xlane.f32.xlu0 %v1141
        %v1307 = vpop.xlane.xlu0 %1306
        %1308 = vmax.xlane.f32.xlu0 %v1146
        %v1309 = vpop.xlane.xlu0 %1308
        %1310 = vmax.xlane.f32.xlu0 %v1151
        %v1311 = vpop.xlane.xlu0 %1310
        %1312 = vmax.xlane.f32.xlu0 %v1156
        %v1313 = vpop.xlane.xlu0 %1312
        %1314 = vmax.xlane.f32.xlu0 %v1161
        %v1315 = vpop.xlane.xlu0 %1314
        %1316 = vmax.xlane.f32.xlu0 %v1166
        %v1317 = vpop.xlane.xlu0 %1316
        %1318 = vmax.xlane.f32.xlu0 %v1171
        %v1319 = vpop.xlane.xlu0 %1318
        %1320 = vmax.xlane.f32.xlu0 %v1176
        %v1321 = vpop.xlane.xlu0 %1320
        %1322 = vmax.xlane.f32.xlu0 %v1181
        %v1323 = vpop.xlane.xlu0 %1322
        %1324 = vmax.xlane.f32.xlu0 %v1186
        %v1325 = vpop.xlane.xlu0 %1324
        %1326 = vmax.xlane.f32.xlu0 %v1191
        %v1327 = vpop.xlane.xlu0 %1326
        %1328 = vmax.xlane.f32.xlu0 %v1196
        %v1329 = vpop.xlane.xlu0 %1328
        %1330 = vmax.xlane.f32.xlu0 %v1201
        %v1331 = vpop.xlane.xlu0 %1330
        %v1332 = vsub.f32 %v691, %v1205
        %v1333 = vsub.f32 %v696, %v1207
        %v1334 = vsub.f32 %v701, %v1209
        %v1335 = vsub.f32 %v706, %v1211
        %v1336 = vsub.f32 %v711, %v1213
        %v1337 = vsub.f32 %v716, %v1215
        %v1338 = vsub.f32 %v721, %v1217
        %v1339 = vsub.f32 %v726, %v1219
        %v1340 = vsub.f32 %v731, %v1221
        %v1341 = vsub.f32 %v736, %v1223
        %v1342 = vsub.f32 %v741, %v1225
        %v1343 = vsub.f32 %v746, %v1227
        %v1344 = vsub.f32 %v751, %v1229
        %v1345 = vsub.f32 %v756, %v1231
        %v1346 = vsub.f32 %v761, %v1233
        %v1347 = vsub.f32 %v766, %v1235
        %v1348 = vsub.f32 %v836, %v1237
        %v1349 = vsub.f32 %v841, %v1239
        %v1350 = vsub.f32 %v846, %v1241
        %v1351 = vsub.f32 %v851, %v1243
        %v1352 = vsub.f32 %v856, %v1245
        %v1353 = vsub.f32 %v861, %v1247
        %v1354 = vsub.f32 %v866, %v1249
        %v1355 = vsub.f32 %v871, %v1251
        %v1356 = vsub.f32 %v876, %v1253
        %v1357 = vsub.f32 %v881, %v1255
        %v1358 = vsub.f32 %v886, %v1257
        %v1359 = vsub.f32 %v891, %v1259
        %v1360 = vsub.f32 %v896, %v1261
        %v1361 = vsub.f32 %v901, %v1263
        %v1362 = vsub.f32 %v906, %v1265
        %v1363 = vsub.f32 %v911, %v1267
        %v1364 = vsub.f32 %v981, %v1269
        %v1365 = vsub.f32 %v986, %v1271
        %v1366 = vsub.f32 %v991, %v1273
        %v1367 = vsub.f32 %v996, %v1275
        %v1368 = vsub.f32 %v1001, %v1277
        %v1369 = vsub.f32 %v1006, %v1279
        %v1370 = vsub.f32 %v1011, %v1281
        %v1371 = vsub.f32 %v1016, %v1283
        %v1372 = vsub.f32 %v1021, %v1285
        %v1373 = vsub.f32 %v1026, %v1287
        %v1374 = vsub.f32 %v1031, %v1289
        %v1375 = vsub.f32 %v1036, %v1291
        %v1376 = vsub.f32 %v1041, %v1293
        %v1377 = vsub.f32 %v1046, %v1295
        %v1378 = vsub.f32 %v1051, %v1297
        %v1379 = vsub.f32 %v1056, %v1299
        %v1380 = vsub.f32 %v1126, %v1301
        %v1381 = vsub.f32 %v1131, %v1303
        %v1382 = vsub.f32 %v1136, %v1305
        %v1383 = vsub.f32 %v1141, %v1307
        %v1384 = vsub.f32 %v1146, %v1309
        %v1385 = vsub.f32 %v1151, %v1311
        %v1386 = vsub.f32 %v1156, %v1313
        %v1387 = vsub.f32 %v1161, %v1315
        %v1388 = vsub.f32 %v1166, %v1317
        %v1389 = vsub.f32 %v1171, %v1319
        %v1390 = vsub.f32 %v1176, %v1321
        %v1391 = vsub.f32 %v1181, %v1323
        %v1392 = vsub.f32 %v1186, %v1325
        %v1393 = vsub.f32 %v1191, %v1327
        %v1394 = vsub.f32 %v1196, %v1329
        %v1395 = vsub.f32 %v1201, %v1331
        %v1396 = vmul.f32 %v1332, 1.442695
        %v1397 = vpow.pop %v1396
        %v1398 = vmul.f32 %v1333, 1.442695
        %v1399 = vpow.pop %v1398
        %v1400 = vmul.f32 %v1334, 1.442695
        %v1401 = vpow.pop %v1400
        %v1402 = vmul.f32 %v1335, 1.442695
        %v1403 = vpow.pop %v1402
        %v1404 = vmul.f32 %v1336, 1.442695
        %v1405 = vpow.pop %v1404
        %v1406 = vmul.f32 %v1337, 1.442695
        %v1407 = vpow.pop %v1406
        %v1408 = vmul.f32 %v1338, 1.442695
        %v1409 = vpow.pop %v1408
        %v1410 = vmul.f32 %v1339, 1.442695
        %v1411 = vpow.pop %v1410
        %v1412 = vmul.f32 %v1340, 1.442695
        %v1413 = vpow.pop %v1412
        %v1414 = vmul.f32 %v1341, 1.442695
        %v1415 = vpow.pop %v1414
        %v1416 = vmul.f32 %v1342, 1.442695
        %v1417 = vpow.pop %v1416
        %v1418 = vmul.f32 %v1343, 1.442695
        %v1419 = vpow.pop %v1418
        %v1420 = vmul.f32 %v1344, 1.442695
        %v1421 = vpow.pop %v1420
        %v1422 = vmul.f32 %v1345, 1.442695
        %v1423 = vpow.pop %v1422
        %v1424 = vmul.f32 %v1346, 1.442695
        %v1425 = vpow.pop %v1424
        %v1426 = vmul.f32 %v1347, 1.442695
        %v1427 = vpow.pop %v1426
        %v1428 = vmul.f32 %v1348, 1.442695
        %v1429 = vpow.pop %v1428
        %v1430 = vmul.f32 %v1349, 1.442695
        %v1431 = vpow.pop %v1430
        %v1432 = vmul.f32 %v1350, 1.442695
        %v1433 = vpow.pop %v1432
        %v1434 = vmul.f32 %v1351, 1.442695
        %v1435 = vpow.pop %v1434
        %v1436 = vmul.f32 %v1352, 1.442695
        %v1437 = vpow.pop %v1436
        %v1438 = vmul.f32 %v1353, 1.442695
        %v1439 = vpow.pop %v1438
        %v1440 = vmul.f32 %v1354, 1.442695
        %v1441 = vpow.pop %v1440
        %v1442 = vmul.f32 %v1355, 1.442695
        %v1443 = vpow.pop %v1442
        %v1444 = vmul.f32 %v1356, 1.442695
        %v1445 = vpow.pop %v1444
        %v1446 = vmul.f32 %v1357, 1.442695
        %v1447 = vpow.pop %v1446
        %v1448 = vmul.f32 %v1358, 1.442695
        %v1449 = vpow.pop %v1448
        %v1450 = vmul.f32 %v1359, 1.442695
        %v1451 = vpow.pop %v1450
        %v1452 = vmul.f32 %v1360, 1.442695
        %v1453 = vpow.pop %v1452
        %v1454 = vmul.f32 %v1361, 1.442695
        %v1455 = vpow.pop %v1454
        %v1456 = vmul.f32 %v1362, 1.442695
        %v1457 = vpow.pop %v1456
        %v1458 = vmul.f32 %v1363, 1.442695
        %v1459 = vpow.pop %v1458
        %v1460 = vmul.f32 %v1364, 1.442695
        %v1461 = vpow.pop %v1460
        %v1462 = vmul.f32 %v1365, 1.442695
        %v1463 = vpow.pop %v1462
        %v1464 = vmul.f32 %v1366, 1.442695
        %v1465 = vpow.pop %v1464
        %v1466 = vmul.f32 %v1367, 1.442695
        %v1467 = vpow.pop %v1466
        %v1468 = vmul.f32 %v1368, 1.442695
        %v1469 = vpow.pop %v1468
        %v1470 = vmul.f32 %v1369, 1.442695
        %v1471 = vpow.pop %v1470
        %v1472 = vmul.f32 %v1370, 1.442695
        %v1473 = vpow.pop %v1472
        %v1474 = vmul.f32 %v1371, 1.442695
        %v1475 = vpow.pop %v1474
        %v1476 = vmul.f32 %v1372, 1.442695
        %v1477 = vpow.pop %v1476
        %v1478 = vmul.f32 %v1373, 1.442695
        %v1479 = vpow.pop %v1478
        %v1480 = vmul.f32 %v1374, 1.442695
        %v1481 = vpow.pop %v1480
        %v1482 = vmul.f32 %v1375, 1.442695
        %v1483 = vpow.pop %v1482
        %v1484 = vmul.f32 %v1376, 1.442695
        %v1485 = vpow.pop %v1484
        %v1486 = vmul.f32 %v1377, 1.442695
        %v1487 = vpow.pop %v1486
        %v1488 = vmul.f32 %v1378, 1.442695
        %v1489 = vpow.pop %v1488
        %v1490 = vmul.f32 %v1379, 1.442695
        %v1491 = vpow.pop %v1490
        %v1492 = vmul.f32 %v1380, 1.442695
        %v1493 = vpow.pop %v1492
        %v1494 = vmul.f32 %v1381, 1.442695
        %v1495 = vpow.pop %v1494
        %v1496 = vmul.f32 %v1382, 1.442695
        %v1497 = vpow.pop %v1496
        %v1498 = vmul.f32 %v1383, 1.442695
        %v1499 = vpow.pop %v1498
        %v1500 = vmul.f32 %v1384, 1.442695
        %v1501 = vpow.pop %v1500
        %v1502 = vmul.f32 %v1385, 1.442695
        %v1503 = vpow.pop %v1502
        %v1504 = vmul.f32 %v1386, 1.442695
        %v1505 = vpow.pop %v1504
        %v1506 = vmul.f32 %v1387, 1.442695
        %v1507 = vpow.pop %v1506
        %v1508 = vmul.f32 %v1388, 1.442695
        %v1509 = vpow.pop %v1508
        %v1510 = vmul.f32 %v1389, 1.442695
        %v1511 = vpow.pop %v1510
        %v1512 = vmul.f32 %v1390, 1.442695
        %v1513 = vpow.pop %v1512
        %v1514 = vmul.f32 %v1391, 1.442695
        %v1515 = vpow.pop %v1514
        %v1516 = vmul.f32 %v1392, 1.442695
        %v1517 = vpow.pop %v1516
        %v1518 = vmul.f32 %v1393, 1.442695
        %v1519 = vpow.pop %v1518
        %v1520 = vmul.f32 %v1394, 1.442695
        %v1521 = vpow.pop %v1520
        %v1522 = vmul.f32 %v1395, 1.442695
        %v1523 = vpow.pop %v1522
        %1524 = vadd.xlane.f32.xlu0 %v1397
        %v1525 = vpop.xlane.xlu0 %1524
        %1526 = vadd.xlane.f32.xlu0 %v1399
        %v1527 = vpop.xlane.xlu0 %1526
        %1528 = vadd.xlane.f32.xlu0 %v1401
        %v1529 = vpop.xlane.xlu0 %1528
        %1530 = vadd.xlane.f32.xlu0 %v1403
        %v1531 = vpop.xlane.xlu0 %1530
        %1532 = vadd.xlane.f32.xlu0 %v1405
        %v1533 = vpop.xlane.xlu0 %1532
        %1534 = vadd.xlane.f32.xlu0 %v1407
        %v1535 = vpop.xlane.xlu0 %1534
        %1536 = vadd.xlane.f32.xlu0 %v1409
        %v1537 = vpop.xlane.xlu0 %1536
        %1538 = vadd.xlane.f32.xlu0 %v1411
        %v1539 = vpop.xlane.xlu0 %1538
        %1540 = vadd.xlane.f32.xlu0 %v1413
        %v1541 = vpop.xlane.xlu0 %1540
        %1542 = vadd.xlane.f32.xlu0 %v1415
        %v1543 = vpop.xlane.xlu0 %1542
        %1544 = vadd.xlane.f32.xlu0 %v1417
        %v1545 = vpop.xlane.xlu0 %1544
        %1546 = vadd.xlane.f32.xlu0 %v1419
        %v1547 = vpop.xlane.xlu0 %1546
        %1548 = vadd.xlane.f32.xlu0 %v1421
        %v1549 = vpop.xlane.xlu0 %1548
        %1550 = vadd.xlane.f32.xlu0 %v1423
        %v1551 = vpop.xlane.xlu0 %1550
        %1552 = vadd.xlane.f32.xlu0 %v1425
        %v1553 = vpop.xlane.xlu0 %1552
        %1554 = vadd.xlane.f32.xlu0 %v1427
        %v1555 = vpop.xlane.xlu0 %1554
        %1556 = vadd.xlane.f32.xlu0 %v1429
        %v1557 = vpop.xlane.xlu0 %1556
        %1558 = vadd.xlane.f32.xlu0 %v1431
        %v1559 = vpop.xlane.xlu0 %1558
        %1560 = vadd.xlane.f32.xlu0 %v1433
        %v1561 = vpop.xlane.xlu0 %1560
        %1562 = vadd.xlane.f32.xlu0 %v1435
        %v1563 = vpop.xlane.xlu0 %1562
        %1564 = vadd.xlane.f32.xlu0 %v1437
        %v1565 = vpop.xlane.xlu0 %1564
        %1566 = vadd.xlane.f32.xlu0 %v1439
        %v1567 = vpop.xlane.xlu0 %1566
        %1568 = vadd.xlane.f32.xlu0 %v1441
        %v1569 = vpop.xlane.xlu0 %1568
        %1570 = vadd.xlane.f32.xlu0 %v1443
        %v1571 = vpop.xlane.xlu0 %1570
        %1572 = vadd.xlane.f32.xlu0 %v1445
        %v1573 = vpop.xlane.xlu0 %1572
        %1574 = vadd.xlane.f32.xlu0 %v1447
        %v1575 = vpop.xlane.xlu0 %1574
        %1576 = vadd.xlane.f32.xlu0 %v1449
        %v1577 = vpop.xlane.xlu0 %1576
        %1578 = vadd.xlane.f32.xlu0 %v1451
        %v1579 = vpop.xlane.xlu0 %1578
        %1580 = vadd.xlane.f32.xlu0 %v1453
        %v1581 = vpop.xlane.xlu0 %1580
        %1582 = vadd.xlane.f32.xlu0 %v1455
        %v1583 = vpop.xlane.xlu0 %1582
        %1584 = vadd.xlane.f32.xlu0 %v1457
        %v1585 = vpop.xlane.xlu0 %1584
        %1586 = vadd.xlane.f32.xlu0 %v1459
        %v1587 = vpop.xlane.xlu0 %1586
        %1588 = vadd.xlane.f32.xlu0 %v1461
        %v1589 = vpop.xlane.xlu0 %1588
        %1590 = vadd.xlane.f32.xlu0 %v1463
        %v1591 = vpop.xlane.xlu0 %1590
        %1592 = vadd.xlane.f32.xlu0 %v1465
        %v1593 = vpop.xlane.xlu0 %1592
        %1594 = vadd.xlane.f32.xlu0 %v1467
        %v1595 = vpop.xlane.xlu0 %1594
        %1596 = vadd.xlane.f32.xlu0 %v1469
        %v1597 = vpop.xlane.xlu0 %1596
        %1598 = vadd.xlane.f32.xlu0 %v1471
        %v1599 = vpop.xlane.xlu0 %1598
        %1600 = vadd.xlane.f32.xlu0 %v1473
        %v1601 = vpop.xlane.xlu0 %1600
        %1602 = vadd.xlane.f32.xlu0 %v1475
        %v1603 = vpop.xlane.xlu0 %1602
        %1604 = vadd.xlane.f32.xlu0 %v1477
        %v1605 = vpop.xlane.xlu0 %1604
        %1606 = vadd.xlane.f32.xlu0 %v1479
        %v1607 = vpop.xlane.xlu0 %1606
        %1608 = vadd.xlane.f32.xlu0 %v1481
        %v1609 = vpop.xlane.xlu0 %1608
        %1610 = vadd.xlane.f32.xlu0 %v1483
        %v1611 = vpop.xlane.xlu0 %1610
        %1612 = vadd.xlane.f32.xlu0 %v1485
        %v1613 = vpop.xlane.xlu0 %1612
        %1614 = vadd.xlane.f32.xlu0 %v1487
        %v1615 = vpop.xlane.xlu0 %1614
        %1616 = vadd.xlane.f32.xlu0 %v1489
        %v1617 = vpop.xlane.xlu0 %1616
        %1618 = vadd.xlane.f32.xlu0 %v1491
        %v1619 = vpop.xlane.xlu0 %1618
        %1620 = vadd.xlane.f32.xlu0 %v1493
        %v1621 = vpop.xlane.xlu0 %1620
        %1622 = vadd.xlane.f32.xlu0 %v1495
        %v1623 = vpop.xlane.xlu0 %1622
        %1624 = vadd.xlane.f32.xlu0 %v1497
        %v1625 = vpop.xlane.xlu0 %1624
        %1626 = vadd.xlane.f32.xlu0 %v1499
        %v1627 = vpop.xlane.xlu0 %1626
        %1628 = vadd.xlane.f32.xlu0 %v1501
        %v1629 = vpop.xlane.xlu0 %1628
        %1630 = vadd.xlane.f32.xlu0 %v1503
        %v1631 = vpop.xlane.xlu0 %1630
        %1632 = vadd.xlane.f32.xlu0 %v1505
        %v1633 = vpop.xlane.xlu0 %1632
        %1634 = vadd.xlane.f32.xlu0 %v1507
        %v1635 = vpop.xlane.xlu0 %1634
        %1636 = vadd.xlane.f32.xlu0 %v1509
        %v1637 = vpop.xlane.xlu0 %1636
        %1638 = vadd.xlane.f32.xlu0 %v1511
        %v1639 = vpop.xlane.xlu0 %1638
        %1640 = vadd.xlane.f32.xlu0 %v1513
        %v1641 = vpop.xlane.xlu0 %1640
        %1642 = vadd.xlane.f32.xlu0 %v1515
        %v1643 = vpop.xlane.xlu0 %1642
        %1644 = vadd.xlane.f32.xlu0 %v1517
        %v1645 = vpop.xlane.xlu0 %1644
        %1646 = vadd.xlane.f32.xlu0 %v1519
        %v1647 = vpop.xlane.xlu0 %1646
        %1648 = vadd.xlane.f32.xlu0 %v1521
        %v1649 = vpop.xlane.xlu0 %1648
        %1650 = vadd.xlane.f32.xlu0 %v1523
        %v1651 = vpop.xlane.xlu0 %1650
        %v1652 = vrcp.pop %v1525
        %v1653 = vrcp.pop %v1527
        %v1654 = vrcp.pop %v1529
        %v1655 = vrcp.pop %v1531
        %v1656 = vrcp.pop %v1533
        %v1657 = vrcp.pop %v1535
        %v1658 = vrcp.pop %v1537
        %v1659 = vrcp.pop %v1539
        %v1660 = vrcp.pop %v1541
        %v1661 = vrcp.pop %v1543
        %v1662 = vrcp.pop %v1545
        %v1663 = vrcp.pop %v1547
        %v1664 = vrcp.pop %v1549
        %v1665 = vrcp.pop %v1551
        %v1666 = vrcp.pop %v1553
        %v1667 = vrcp.pop %v1555
        %v1668 = vrcp.pop %v1557
        %v1669 = vrcp.pop %v1559
        %v1670 = vrcp.pop %v1561
        %v1671 = vrcp.pop %v1563
        %v1672 = vrcp.pop %v1565
        %v1673 = vrcp.pop %v1567
        %v1674 = vrcp.pop %v1569
        %v1675 = vrcp.pop %v1571
        %v1676 = vrcp.pop %v1573
        %v1677 = vrcp.pop %v1575
        %v1678 = vrcp.pop %v1577
        %v1679 = vrcp.pop %v1579
        %v1680 = vrcp.pop %v1581
        %v1681 = vrcp.pop %v1583
        %v1682 = vrcp.pop %v1585
        %v1683 = vrcp.pop %v1587
        %v1684 = vrcp.pop %v1589
        %v1685 = vrcp.pop %v1591
        %v1686 = vrcp.pop %v1593
        %v1687 = vrcp.pop %v1595
        %v1688 = vrcp.pop %v1597
        %v1689 = vrcp.pop %v1599
        %v1690 = vrcp.pop %v1601
        %v1691 = vrcp.pop %v1603
        %v1692 = vrcp.pop %v1605
        %v1693 = vrcp.pop %v1607
        %v1694 = vrcp.pop %v1609
        %v1695 = vrcp.pop %v1611
        %v1696 = vrcp.pop %v1613
        %v1697 = vrcp.pop %v1615
        %v1698 = vrcp.pop %v1617
        %v1699 = vrcp.pop %v1619
        %v1700 = vrcp.pop %v1621
        %v1701 = vrcp.pop %v1623
        %v1702 = vrcp.pop %v1625
        %v1703 = vrcp.pop %v1627
        %v1704 = vrcp.pop %v1629
        %v1705 = vrcp.pop %v1631
        %v1706 = vrcp.pop %v1633
        %v1707 = vrcp.pop %v1635
        %v1708 = vrcp.pop %v1637
        %v1709 = vrcp.pop %v1639
        %v1710 = vrcp.pop %v1641
        %v1711 = vrcp.pop %v1643
        %v1712 = vrcp.pop %v1645
        %v1713 = vrcp.pop %v1647
        %v1714 = vrcp.pop %v1649
        %v1715 = vrcp.pop %v1651
        %v1716 = vmul.f32 %v1397, %v1652
        %v1717 = vmul.f32 %v1399, %v1653
        %v1718 = vmul.f32 %v1401, %v1654
        %v1719 = vmul.f32 %v1403, %v1655
        %v1720 = vmul.f32 %v1405, %v1656
        %v1721 = vmul.f32 %v1407, %v1657
        %v1722 = vmul.f32 %v1409, %v1658
        %v1723 = vmul.f32 %v1411, %v1659
        %v1724 = vmul.f32 %v1413, %v1660
        %v1725 = vmul.f32 %v1415, %v1661
        %v1726 = vmul.f32 %v1417, %v1662
        %v1727 = vmul.f32 %v1419, %v1663
        %v1728 = vmul.f32 %v1421, %v1664
        %v1729 = vmul.f32 %v1423, %v1665
        %v1730 = vmul.f32 %v1425, %v1666
        %v1731 = vmul.f32 %v1427, %v1667
        %v1732 = vmul.f32 %v1429, %v1668
        %v1733 = vmul.f32 %v1431, %v1669
        %v1734 = vmul.f32 %v1433, %v1670
        %v1735 = vmul.f32 %v1435, %v1671
        %v1736 = vmul.f32 %v1437, %v1672
        %v1737 = vmul.f32 %v1439, %v1673
        %v1738 = vmul.f32 %v1441, %v1674
        %v1739 = vmul.f32 %v1443, %v1675
        %v1740 = vmul.f32 %v1445, %v1676
        %v1741 = vmul.f32 %v1447, %v1677
        %v1742 = vmul.f32 %v1449, %v1678
        %v1743 = vmul.f32 %v1451, %v1679
        %v1744 = vmul.f32 %v1453, %v1680
        %v1745 = vmul.f32 %v1455, %v1681
        %v1746 = vmul.f32 %v1457, %v1682
        %v1747 = vmul.f32 %v1459, %v1683
        %v1748 = vmul.f32 %v1461, %v1684
        %v1749 = vmul.f32 %v1463, %v1685
        %v1750 = vmul.f32 %v1465, %v1686
        %v1751 = vmul.f32 %v1467, %v1687
        %v1752 = vmul.f32 %v1469, %v1688
        %v1753 = vmul.f32 %v1471, %v1689
        %v1754 = vmul.f32 %v1473, %v1690
        %v1755 = vmul.f32 %v1475, %v1691
        %v1756 = vmul.f32 %v1477, %v1692
        %v1757 = vmul.f32 %v1479, %v1693
        %v1758 = vmul.f32 %v1481, %v1694
        %v1759 = vmul.f32 %v1483, %v1695
        %v1760 = vmul.f32 %v1485, %v1696
        %v1761 = vmul.f32 %v1487, %v1697
        %v1762 = vmul.f32 %v1489, %v1698
        %v1763 = vmul.f32 %v1491, %v1699
        %v1764 = vmul.f32 %v1493, %v1700
        %v1765 = vmul.f32 %v1495, %v1701
        %v1766 = vmul.f32 %v1497, %v1702
        %v1767 = vmul.f32 %v1499, %v1703
        %v1768 = vmul.f32 %v1501, %v1704
        %v1769 = vmul.f32 %v1503, %v1705
        %v1770 = vmul.f32 %v1505, %v1706
        %v1771 = vmul.f32 %v1507, %v1707
        %v1772 = vmul.f32 %v1509, %v1708
        %v1773 = vmul.f32 %v1511, %v1709
        %v1774 = vmul.f32 %v1513, %v1710
        %v1775 = vmul.f32 %v1515, %v1711
        %v1776 = vmul.f32 %v1517, %v1712
        %v1777 = vmul.f32 %v1519, %v1713
        %v1778 = vmul.f32 %v1521, %v1714
        %v1779 = vmul.f32 %v1523, %v1715
        %1780 = vst [vmem:[%s354] sm:$0xff] %v1716
        %1781 = vst [vmem:[%s354 + $0x8] sm:$0xff] %v1717
        %1782 = vst [vmem:[%s354 + $0x10] sm:$0xff] %v1718
        %1783 = vst [vmem:[%s354 + $0x18] sm:$0xff] %v1719
        %1784 = vst [vmem:[%s354 + $0x20] sm:$0xff] %v1720
        %1785 = vst [vmem:[%s354 + $0x28] sm:$0xff] %v1721
        %1786 = vst [vmem:[%s354 + $0x30] sm:$0xff] %v1722
        %1787 = vst [vmem:[%s354 + $0x38] sm:$0xff] %v1723
        %1788 = vst [vmem:[%s354 + $0x40] sm:$0xff] %v1724
        %1789 = vst [vmem:[%s354 + $0x48] sm:$0xff] %v1725
        %1790 = vst [vmem:[%s354 + $0x50] sm:$0xff] %v1726
        %1791 = vst [vmem:[%s354 + $0x58] sm:$0xff] %v1727
        %1792 = vst [vmem:[%s354 + $0x60] sm:$0xff] %v1728
        %1793 = vst [vmem:[%s354 + $0x68] sm:$0xff] %v1729
        %1794 = vst [vmem:[%s354 + $0x70] sm:$0xff] %v1730
        %1795 = vst [vmem:[%s354 + $0x78] sm:$0xff] %v1731
        %1796 = vst [vmem:[%s354 + $0x80] sm:$0xff] %v1732
        %1797 = vst [vmem:[%s354 + $0x88] sm:$0xff] %v1733
        %1798 = vst [vmem:[%s354 + $0x90] sm:$0xff] %v1734
        %1799 = vst [vmem:[%s354 + $0x98] sm:$0xff] %v1735
        %1800 = vst [vmem:[%s354 + $0xa0] sm:$0xff] %v1736
        %1801 = vst [vmem:[%s354 + $0xa8] sm:$0xff] %v1737
        %1802 = vst [vmem:[%s354 + $0xb0] sm:$0xff] %v1738
        %1803 = vst [vmem:[%s354 + $0xb8] sm:$0xff] %v1739
        %1804 = vst [vmem:[%s354 + $0xc0] sm:$0xff] %v1740
        %1805 = vst [vmem:[%s354 + $0xc8] sm:$0xff] %v1741
        %1806 = vst [vmem:[%s354 + $0xd0] sm:$0xff] %v1742
        %1807 = vst [vmem:[%s354 + $0xd8] sm:$0xff] %v1743
        %1808 = vst [vmem:[%s354 + $0xe0] sm:$0xff] %v1744
        %1809 = vst [vmem:[%s354 + $0xe8] sm:$0xff] %v1745
        %1810 = vst [vmem:[%s354 + $0xf0] sm:$0xff] %v1746
        %1811 = vst [vmem:[%s354 + $0xf8] sm:$0xff] %v1747
        %1812 = vst [vmem:[%s354 + $0x100] sm:$0xff] %v1748
        %1813 = vst [vmem:[%s354 + $0x108] sm:$0xff] %v1749
        %1814 = vst [vmem:[%s354 + $0x110] sm:$0xff] %v1750
        %1815 = vst [vmem:[%s354 + $0x118] sm:$0xff] %v1751
        %1816 = vst [vmem:[%s354 + $0x120] sm:$0xff] %v1752
        %1817 = vst [vmem:[%s354 + $0x128] sm:$0xff] %v1753
        %1818 = vst [vmem:[%s354 + $0x130] sm:$0xff] %v1754
        %1819 = vst [vmem:[%s354 + $0x138] sm:$0xff] %v1755
        %1820 = vst [vmem:[%s354 + $0x140] sm:$0xff] %v1756
        %1821 = vst [vmem:[%s354 + $0x148] sm:$0xff] %v1757
        %1822 = vst [vmem:[%s354 + $0x150] sm:$0xff] %v1758
        %1823 = vst [vmem:[%s354 + $0x158] sm:$0xff] %v1759
        %1824 = vst [vmem:[%s354 + $0x160] sm:$0xff] %v1760
        %1825 = vst [vmem:[%s354 + $0x168] sm:$0xff] %v1761
        %1826 = vst [vmem:[%s354 + $0x170] sm:$0xff] %v1762
        %1827 = vst [vmem:[%s354 + $0x178] sm:$0xff] %v1763
        %1828 = vst [vmem:[%s354 + $0x180] sm:$0xff] %v1764
        %1829 = vst [vmem:[%s354 + $0x188] sm:$0xff] %v1765
        %1830 = vst [vmem:[%s354 + $0x190] sm:$0xff] %v1766
        %1831 = vst [vmem:[%s354 + $0x198] sm:$0xff] %v1767
        %1832 = vst [vmem:[%s354 + $0x1a0] sm:$0xff] %v1768
        %1833 = vst [vmem:[%s354 + $0x1a8] sm:$0xff] %v1769
        %1834 = vst [vmem:[%s354 + $0x1b0] sm:$0xff] %v1770
        %1835 = vst [vmem:[%s354 + $0x1b8] sm:$0xff] %v1771
        %1836 = vst [vmem:[%s354 + $0x1c0] sm:$0xff] %v1772
        %1837 = vst [vmem:[%s354 + $0x1c8] sm:$0xff] %v1773
        %1838 = vst [vmem:[%s354 + $0x1d0] sm:$0xff] %v1774
        %1839 = vst [vmem:[%s354 + $0x1d8] sm:$0xff] %v1775
        %1840 = vst [vmem:[%s354 + $0x1e0] sm:$0xff] %v1776
        %1841 = vst [vmem:[%s354 + $0x1e8] sm:$0xff] %v1777
        %1842 = vst [vmem:[%s354 + $0x1f0] sm:$0xff] %v1778
        %1843 = vst [vmem:[%s354 + $0x1f8] sm:$0xff] %v1779
        %1844 = vmatprep.subr.mxu0 0.0
        %1845 = vmatpush1.msra.mxu0 %v560
        %1846 = vmatprep.subr.mxu0 0.0
        %1847 = vmatpush1.msra.mxu0 %v561
        %1848 = vmatprep.subr.mxu0 0.0
        %1849 = vmatpush1.msra.mxu0 %v562
        %1850 = vmatprep.subr.mxu0 0.0
        %1851 = vmatpush1.msra.mxu0 %v563
        %1852 = vmatprep.subr.mxu0 0.0
        %1853 = vmatpush1.msra.mxu0 %v564
        %1854 = vmatprep.subr.mxu0 0.0
        %1855 = vmatpush1.msra.mxu0 %v565
        %1856 = vmatprep.subr.mxu0 0.0
        %1857 = vmatpush1.msra.mxu0 %v566
        %1858 = vmatprep.subr.mxu0 0.0
        %1859 = vmatpush1.msra.mxu0 %v567
        %1860 = vmatprep.subr.mxu0 0.0
        %1861 = vmatpush1.msra.mxu0 %v568
        %1862 = vmatprep.subr.mxu0 0.0
        %1863 = vmatpush1.msra.mxu0 %v569
        %1864 = vmatprep.subr.mxu0 0.0
        %1865 = vmatpush1.msra.mxu0 %v570
        %1866 = vmatprep.subr.mxu0 0.0
        %1867 = vmatpush1.msra.mxu0 %v571
        %1868 = vmatprep.subr.mxu0 0.0
        %1869 = vmatpush1.msra.mxu0 %v572
        %1870 = vmatprep.subr.mxu0 0.0
        %1871 = vmatpush1.msra.mxu0 %v573
        %1872 = vmatprep.subr.mxu0 0.0
        %1873 = vmatpush1.msra.mxu0 %v574
        %1874 = vmatprep.subr.mxu0 0.0
        %1875 = vmatpush1.msra.mxu0 %v575
        %1876 = vmatprep.subr.mxu0 0.0
        %1877 = vmatpush1.msra.mxu0 0.0
        %1878 = vmatprep.subr.mxu0 0.0
        %1879 = vmatpush1.msra.mxu0 0.0
        %1880 = vmatprep.subr.mxu0 0.0
        %1881 = vmatpush1.msra.mxu0 0.0
        %1882 = vmatprep.subr.mxu0 0.0
        %1883 = vmatpush1.msra.mxu0 0.0
        %1884 = vmatprep.subr.mxu0 0.0
        %1885 = vmatpush1.msra.mxu0 0.0
        %1886 = vmatprep.subr.mxu0 0.0
        %1887 = vmatpush1.msra.mxu0 0.0
        %1888 = vmatprep.subr.mxu0 0.0
        %1889 = vmatpush1.msra.mxu0 0.0
        %1890 = vmatprep.subr.mxu0 0.0
        %1891 = vmatpush1.msra.mxu0 0.0
        %1892 = vmatprep.subr.mxu0 0.0
        %1893 = vmatpush1.msra.mxu0 0.0
        %1894 = vmatprep.subr.mxu0 0.0
        %1895 = vmatpush1.msra.mxu0 0.0
        %1896 = vmatprep.subr.mxu0 0.0
        %1897 = vmatpush1.msra.mxu0 0.0
        %1898 = vmatprep.subr.mxu0 0.0
        %1899 = vmatpush1.msra.mxu0 0.0
        %1900 = vmatprep.subr.mxu0 0.0
        %1901 = vmatpush1.msra.mxu0 0.0
        %1902 = vmatprep.subr.mxu0 0.0
        %1903 = vmatpush1.msra.mxu0 0.0
        %1904 = vmatprep.subr.mxu0 0.0
        %1905 = vmatpush1.msra.mxu0 0.0
        %1906 = vmatprep.subr.mxu0 0.0
        %1907 = vmatpush1.msra.mxu0 0.0
        %1908 = vmatprep.mubr.f32.mxu0 0.0
        %1909 = vmatmul.mubr.f32.gmra.mrb[0].mxu0 %v1716
        %v1910 = vpop.f32.mrb[0].mxu0
        %v1911 = vadd.f32 0.0, %v1910
        %v1912 = vpop.f32.mrb[0].mxu0
        %1913 = vmatprep.mubr.f32.mxu0 0.0
        %1914 = vmatmul.mubr.f32.gmra.mrb[0].mxu0 %v1717
        %v1915 = vpop.f32.mrb[0].mxu0
        %v1916 = vadd.f32 0.0, %v1915
        %v1917 = vpop.f32.mrb[0].mxu0
        %1918 = vmatprep.mubr.f32.mxu0 0.0
        %1919 = vmatmul.mubr.f32.gmra.mrb[0].mxu0 %v1718
        %v1920 = vpop.f32.mrb[0].mxu0
        %v1921 = vadd.f32 0.0, %v1920
        %v1922 = vpop.f32.mrb[0].mxu0
        %1923 = vmatprep.mubr.f32.mxu0 0.0
        %1924 = vmatmul.mubr.f32.gmra.mrb[0].mxu0 %v1719
        %v1925 = vpop.f32.mrb[0].mxu0
        %v1926 = vadd.f32 0.0, %v1925
        %v1927 = vpop.f32.mrb[0].mxu0
        %1928 = vmatprep.mubr.f32.mxu0 0.0
        %1929 = vmatmul.mubr.f32.gmra.mrb[0].mxu0 %v1720
        %v1930 = vpop.f32.mrb[0].mxu0
        %v1931 = vadd.f32 0.0, %v1930
        %v1932 = vpop.f32.mrb[0].mxu0
        %1933 = vmatprep.mubr.f32.mxu0 0.0
        %1934 = vmatmul.mubr.f32.gmra.mrb[0].mxu0 %v1721
        %v1935 = vpop.f32.mrb[0].mxu0
        %v1936 = vadd.f32 0.0, %v1935
        %v1937 = vpop.f32.mrb[0].mxu0
        %1938 = vmatprep.mubr.f32.mxu0 0.0
        %1939 = vmatmul.mubr.f32.gmra.mrb[0].mxu0 %v1722
        %v1940 = vpop.f32.mrb[0].mxu0
        %v1941 = vadd.f32 0.0, %v1940
        %v1942 = vpop.f32.mrb[0].mxu0
        %1943 = vmatprep.mubr.f32.mxu0 0.0
        %1944 = vmatmul.mubr.f32.gmra.mrb[0].mxu0 %v1723
        %v1945 = vpop.f32.mrb[0].mxu0
        %v1946 = vadd.f32 0.0, %v1945
        %v1947 = vpop.f32.mrb[0].mxu0
        %1948 = vmatprep.mubr.f32.mxu0 0.0
        %1949 = vmatmul.mubr.f32.gmra.mrb[0].mxu0 %v1724
        %v1950 = vpop.f32.mrb[0].mxu0
        %v1951 = vadd.f32 0.0, %v1950
        %v1952 = vpop.f32.mrb[0].mxu0
        %1953 = vmatprep.mubr.f32.mxu0 0.0
        %1954 = vmatmul.mubr.f32.gmra.mrb[0].mxu0 %v1725
        %v1955 = vpop.f32.mrb[0].mxu0
        %v1956 = vadd.f32 0.0, %v1955
        %v1957 = vpop.f32.mrb[0].mxu0
        %1958 = vmatprep.mubr.f32.mxu0 0.0
        %1959 = vmatmul.mubr.f32.gmra.mrb[0].mxu0 %v1726
        %v1960 = vpop.f32.mrb[0].mxu0
        %v1961 = vadd.f32 0.0, %v1960
        %v1962 = vpop.f32.mrb[0].mxu0
        %1963 = vmatprep.mubr.f32.mxu0 0.0
        %1964 = vmatmul.mubr.f32.gmra.mrb[0].mxu0 %v1727
        %v1965 = vpop.f32.mrb[0].mxu0
        %v1966 = vadd.f32 0.0, %v1965
        %v1967 = vpop.f32.mrb[0].mxu0
        %1968 = vmatprep.mubr.f32.mxu0 0.0
        %1969 = vmatmul.mubr.f32.gmra.mrb[0].mxu0 %v1728
        %v1970 = vpop.f32.mrb[0].mxu0
        %v1971 = vadd.f32 0.0, %v1970
        %v1972 = vpop.f32.mrb[0].mxu0
        %1973 = vmatprep.mubr.f32.mxu0 0.0
        %1974 = vmatmul.mubr.f32.gmra.mrb[0].mxu0 %v1729
        %v1975 = vpop.f32.mrb[0].mxu0
        %v1976 = vadd.f32 0.0, %v1975
        %v1977 = vpop.f32.mrb[0].mxu0
        %1978 = vmatprep.mubr.f32.mxu0 0.0
        %1979 = vmatmul.mubr.f32.gmra.mrb[0].mxu0 %v1730
        %v1980 = vpop.f32.mrb[0].mxu0
        %v1981 = vadd.f32 0.0, %v1980
        %v1982 = vpop.f32.mrb[0].mxu0
        %1983 = vmatprep.mubr.f32.mxu0 0.0
        %1984 = vmatmul.mubr.f32.gmra.mrb[0].mxu0 %v1731
        %v1985 = vpop.f32.mrb[0].mxu0
        %v1986 = vadd.f32 0.0, %v1985
        %v1987 = vpop.f32.mrb[0].mxu0
        %1988 = vdwg.mxu0
        %1989 = vmatprep.subr.mxu0 0.0
        %1990 = vmatpush1.msra.mxu0 %v576
        %1991 = vmatprep.subr.mxu0 0.0
        %1992 = vmatpush1.msra.mxu0 %v577
        %1993 = vmatprep.subr.mxu0 0.0
        %1994 = vmatpush1.msra.mxu0 %v578
        %1995 = vmatprep.subr.mxu0 0.0
        %1996 = vmatpush1.msra.mxu0 %v579
        %1997 = vmatprep.subr.mxu0 0.0
        %1998 = vmatpush1.msra.mxu0 %v580
        %1999 = vmatprep.subr.mxu0 0.0
        %2000 = vmatpush1.msra.mxu0 %v581
        %2001 = vmatprep.subr.mxu0 0.0
        %2002 = vmatpush1.msra.mxu0 %v582
        %2003 = vmatprep.subr.mxu0 0.0
        %2004 = vmatpush1.msra.mxu0 %v583
        %2005 = vmatprep.subr.mxu0 0.0
        %2006 = vmatpush1.msra.mxu0 %v584
        %2007 = vmatprep.subr.mxu0 0.0
        %2008 = vmatpush1.msra.mxu0 %v585
        %2009 = vmatprep.subr.mxu0 0.0
        %2010 = vmatpush1.msra.mxu0 %v586
        %2011 = vmatprep.subr.mxu0 0.0
        %2012 = vmatpush1.msra.mxu0 %v587
        %2013 = vmatprep.subr.mxu0 0.0
        %2014 = vmatpush1.msra.mxu0 %v588
        %2015 = vmatprep.subr.mxu0 0.0
        %2016 = vmatpush1.msra.mxu0 %v589
        %2017 = vmatprep.subr.mxu0 0.0
        %2018 = vmatpush1.msra.mxu0 %v590
        %2019 = vmatprep.subr.mxu0 0.0
        %2020 = vmatpush1.msra.mxu0 %v591
        %2021 = vmatprep.subr.mxu0 0.0
        %2022 = vmatpush1.msra.mxu0 0.0
        %2023 = vmatprep.subr.mxu0 0.0
        %2024 = vmatpush1.msra.mxu0 0.0
        %2025 = vmatprep.subr.mxu0 0.0
        %2026 = vmatpush1.msra.mxu0 0.0
        %2027 = vmatprep.subr.mxu0 0.0
        %2028 = vmatpush1.msra.mxu0 0.0
        %2029 = vmatprep.subr.mxu0 0.0
        %2030 = vmatpush1.msra.mxu0 0.0
        %2031 = vmatprep.subr.mxu0 0.0
        %2032 = vmatpush1.msra.mxu0 0.0
        %2033 = vmatprep.subr.mxu0 0.0
        %2034 = vmatpush1.msra.mxu0 0.0
        %2035 = vmatprep.subr.mxu0 0.0
        %2036 = vmatpush1.msra.mxu0 0.0
        %2037 = vmatprep.subr.mxu0 0.0
        %2038 = vmatpush1.msra.mxu0 0.0
        %2039 = vmatprep.subr.mxu0 0.0
        %2040 = vmatpush1.msra.mxu0 0.0
        %2041 = vmatprep.subr.mxu0 0.0
        %2042 = vmatpush1.msra.mxu0 0.0
        %2043 = vmatprep.subr.mxu0 0.0
        %2044 = vmatpush1.msra.mxu0 0.0
        %2045 = vmatprep.subr.mxu0 0.0
        %2046 = vmatpush1.msra.mxu0 0.0
        %2047 = vmatprep.subr.mxu0 0.0
        %2048 = vmatpush1.msra.mxu0 0.0
        %2049 = vmatprep.subr.mxu0 0.0
        %2050 = vmatpush1.msra.mxu0 0.0
        %2051 = vmatprep.subr.mxu0 0.0
        %2052 = vmatpush1.msra.mxu0 0.0
        %2053 = vmatprep.mubr.f32.mxu0 0.0
        %2054 = vmatmul.mubr.f32.gmra.mrb[0].mxu0 %v1732
        %v2055 = vpop.f32.mrb[0].mxu0
        %v2056 = vadd.f32 0.0, %v2055
        %v2057 = vpop.f32.mrb[0].mxu0
        %2058 = vmatprep.mubr.f32.mxu0 0.0
        %2059 = vmatmul.mubr.f32.gmra.mrb[0].mxu0 %v1733
        %v2060 = vpop.f32.mrb[0].mxu0
        %v2061 = vadd.f32 0.0, %v2060
        %v2062 = vpop.f32.mrb[0].mxu0
        %2063 = vmatprep.mubr.f32.mxu0 0.0
        %2064 = vmatmul.mubr.f32.gmra.mrb[0].mxu0 %v1734
        %v2065 = vpop.f32.mrb[0].mxu0
        %v2066 = vadd.f32 0.0, %v2065
        %v2067 = vpop.f32.mrb[0].mxu0
        %2068 = vmatprep.mubr.f32.mxu0 0.0
        %2069 = vmatmul.mubr.f32.gmra.mrb[0].mxu0 %v1735
        %v2070 = vpop.f32.mrb[0].mxu0
        %v2071 = vadd.f32 0.0, %v2070
        %v2072 = vpop.f32.mrb[0].mxu0
        %2073 = vmatprep.mubr.f32.mxu0 0.0
        %2074 = vmatmul.mubr.f32.gmra.mrb[0].mxu0 %v1736
        %v2075 = vpop.f32.mrb[0].mxu0
        %v2076 = vadd.f32 0.0, %v2075
        %v2077 = vpop.f32.mrb[0].mxu0
        %2078 = vmatprep.mubr.f32.mxu0 0.0
        %2079 = vmatmul.mubr.f32.gmra.mrb[0].mxu0 %v1737
        %v2080 = vpop.f32.mrb[0].mxu0
        %v2081 = vadd.f32 0.0, %v2080
        %v2082 = vpop.f32.mrb[0].mxu0
        %2083 = vmatprep.mubr.f32.mxu0 0.0
        %2084 = vmatmul.mubr.f32.gmra.mrb[0].mxu0 %v1738
        %v2085 = vpop.f32.mrb[0].mxu0
        %v2086 = vadd.f32 0.0, %v2085
        %v2087 = vpop.f32.mrb[0].mxu0
        %2088 = vmatprep.mubr.f32.mxu0 0.0
        %2089 = vmatmul.mubr.f32.gmra.mrb[0].mxu0 %v1739
        %v2090 = vpop.f32.mrb[0].mxu0
        %v2091 = vadd.f32 0.0, %v2090
        %v2092 = vpop.f32.mrb[0].mxu0
        %2093 = vmatprep.mubr.f32.mxu0 0.0
        %2094 = vmatmul.mubr.f32.gmra.mrb[0].mxu0 %v1740
        %v2095 = vpop.f32.mrb[0].mxu0
        %v2096 = vadd.f32 0.0, %v2095
        %v2097 = vpop.f32.mrb[0].mxu0
        %2098 = vmatprep.mubr.f32.mxu0 0.0
        %2099 = vmatmul.mubr.f32.gmra.mrb[0].mxu0 %v1741
        %v2100 = vpop.f32.mrb[0].mxu0
        %v2101 = vadd.f32 0.0, %v2100
        %v2102 = vpop.f32.mrb[0].mxu0
        %2103 = vmatprep.mubr.f32.mxu0 0.0
        %2104 = vmatmul.mubr.f32.gmra.mrb[0].mxu0 %v1742
        %v2105 = vpop.f32.mrb[0].mxu0
        %v2106 = vadd.f32 0.0, %v2105
        %v2107 = vpop.f32.mrb[0].mxu0
        %2108 = vmatprep.mubr.f32.mxu0 0.0
        %2109 = vmatmul.mubr.f32.gmra.mrb[0].mxu0 %v1743
        %v2110 = vpop.f32.mrb[0].mxu0
        %v2111 = vadd.f32 0.0, %v2110
        %v2112 = vpop.f32.mrb[0].mxu0
        %2113 = vmatprep.mubr.f32.mxu0 0.0
        %2114 = vmatmul.mubr.f32.gmra.mrb[0].mxu0 %v1744
        %v2115 = vpop.f32.mrb[0].mxu0
        %v2116 = vadd.f32 0.0, %v2115
        %v2117 = vpop.f32.mrb[0].mxu0
        %2118 = vmatprep.mubr.f32.mxu0 0.0
        %2119 = vmatmul.mubr.f32.gmra.mrb[0].mxu0 %v1745
        %v2120 = vpop.f32.mrb[0].mxu0
        %v2121 = vadd.f32 0.0, %v2120
        %v2122 = vpop.f32.mrb[0].mxu0
        %2123 = vmatprep.mubr.f32.mxu0 0.0
        %2124 = vmatmul.mubr.f32.gmra.mrb[0].mxu0 %v1746
        %v2125 = vpop.f32.mrb[0].mxu0
        %v2126 = vadd.f32 0.0, %v2125
        %v2127 = vpop.f32.mrb[0].mxu0
        %2128 = vmatprep.mubr.f32.mxu0 0.0
        %2129 = vmatmul.mubr.f32.gmra.mrb[0].mxu0 %v1747
        %v2130 = vpop.f32.mrb[0].mxu0
        %v2131 = vadd.f32 0.0, %v2130
        %v2132 = vpop.f32.mrb[0].mxu0
        %2133 = vdwg.mxu0
        %2134 = vmatprep.subr.mxu0 0.0
        %2135 = vmatpush1.msra.mxu0 %v592
        %2136 = vmatprep.subr.mxu0 0.0
        %2137 = vmatpush1.msra.mxu0 %v593
        %2138 = vmatprep.subr.mxu0 0.0
        %2139 = vmatpush1.msra.mxu0 %v594
        %2140 = vmatprep.subr.mxu0 0.0
        %2141 = vmatpush1.msra.mxu0 %v595
        %2142 = vmatprep.subr.mxu0 0.0
        %2143 = vmatpush1.msra.mxu0 %v596
        %2144 = vmatprep.subr.mxu0 0.0
        %2145 = vmatpush1.msra.mxu0 %v597
        %2146 = vmatprep.subr.mxu0 0.0
        %2147 = vmatpush1.msra.mxu0 %v598
        %2148 = vmatprep.subr.mxu0 0.0
        %2149 = vmatpush1.msra.mxu0 %v599
        %2150 = vmatprep.subr.mxu0 0.0
        %2151 = vmatpush1.msra.mxu0 %v600
        %2152 = vmatprep.subr.mxu0 0.0
        %2153 = vmatpush1.msra.mxu0 %v601
        %2154 = vmatprep.subr.mxu0 0.0
        %2155 = vmatpush1.msra.mxu0 %v602
        %2156 = vmatprep.subr.mxu0 0.0
        %2157 = vmatpush1.msra.mxu0 %v603
        %2158 = vmatprep.subr.mxu0 0.0
        %2159 = vmatpush1.msra.mxu0 %v604
        %2160 = vmatprep.subr.mxu0 0.0
        %2161 = vmatpush1.msra.mxu0 %v605
        %2162 = vmatprep.subr.mxu0 0.0
        %2163 = vmatpush1.msra.mxu0 %v606
        %2164 = vmatprep.subr.mxu0 0.0
        %2165 = vmatpush1.msra.mxu0 %v607
        %2166 = vmatprep.subr.mxu0 0.0
        %2167 = vmatpush1.msra.mxu0 0.0
        %2168 = vmatprep.subr.mxu0 0.0
        %2169 = vmatpush1.msra.mxu0 0.0
        %2170 = vmatprep.subr.mxu0 0.0
        %2171 = vmatpush1.msra.mxu0 0.0
        %2172 = vmatprep.subr.mxu0 0.0
        %2173 = vmatpush1.msra.mxu0 0.0
        %2174 = vmatprep.subr.mxu0 0.0
        %2175 = vmatpush1.msra.mxu0 0.0
        %2176 = vmatprep.subr.mxu0 0.0
        %2177 = vmatpush1.msra.mxu0 0.0
        %2178 = vmatprep.subr.mxu0 0.0
        %2179 = vmatpush1.msra.mxu0 0.0
        %2180 = vmatprep.subr.mxu0 0.0
        %2181 = vmatpush1.msra.mxu0 0.0
        %2182 = vmatprep.subr.mxu0 0.0
        %2183 = vmatpush1.msra.mxu0 0.0
        %2184 = vmatprep.subr.mxu0 0.0
        %2185 = vmatpush1.msra.mxu0 0.0
        %2186 = vmatprep.subr.mxu0 0.0
        %2187 = vmatpush1.msra.mxu0 0.0
        %2188 = vmatprep.subr.mxu0 0.0
        %2189 = vmatpush1.msra.mxu0 0.0
        %2190 = vmatprep.subr.mxu0 0.0
        %2191 = vmatpush1.msra.mxu0 0.0
        %2192 = vmatprep.subr.mxu0 0.0
        %2193 = vmatpush1.msra.mxu0 0.0
        %2194 = vmatprep.subr.mxu0 0.0
        %2195 = vmatpush1.msra.mxu0 0.0
        %2196 = vmatprep.subr.mxu0 0.0
        %2197 = vmatpush1.msra.mxu0 0.0
        %2198 = vmatprep.mubr.f32.mxu0 0.0
        %2199 = vmatmul.mubr.f32.gmra.mrb[0].mxu0 %v1748
        %v2200 = vpop.f32.mrb[0].mxu0
        %v2201 = vadd.f32 0.0, %v2200
        %v2202 = vpop.f32.mrb[0].mxu0
        %2203 = vmatprep.mubr.f32.mxu0 0.0
        %2204 = vmatmul.mubr.f32.gmra.mrb[0].mxu0 %v1749
        %v2205 = vpop.f32.mrb[0].mxu0
        %v2206 = vadd.f32 0.0, %v2205
        %v2207 = vpop.f32.mrb[0].mxu0
        %2208 = vmatprep.mubr.f32.mxu0 0.0
        %2209 = vmatmul.mubr.f32.gmra.mrb[0].mxu0 %v1750
        %v2210 = vpop.f32.mrb[0].mxu0
        %v2211 = vadd.f32 0.0, %v2210
        %v2212 = vpop.f32.mrb[0].mxu0
        %2213 = vmatprep.mubr.f32.mxu0 0.0
        %2214 = vmatmul.mubr.f32.gmra.mrb[0].mxu0 %v1751
        %v2215 = vpop.f32.mrb[0].mxu0
        %v2216 = vadd.f32 0.0, %v2215
        %v2217 = vpop.f32.mrb[0].mxu0
        %2218 = vmatprep.mubr.f32.mxu0 0.0
        %2219 = vmatmul.mubr.f32.gmra.mrb[0].mxu0 %v1752
        %v2220 = vpop.f32.mrb[0].mxu0
        %v2221 = vadd.f32 0.0, %v2220
        %v2222 = vpop.f32.mrb[0].mxu0
        %2223 = vmatprep.mubr.f32.mxu0 0.0
        %2224 = vmatmul.mubr.f32.gmra.mrb[0].mxu0 %v1753
        %v2225 = vpop.f32.mrb[0].mxu0
        %v2226 = vadd.f32 0.0, %v2225
        %v2227 = vpop.f32.mrb[0].mxu0
        %2228 = vmatprep.mubr.f32.mxu0 0.0
        %2229 = vmatmul.mubr.f32.gmra.mrb[0].mxu0 %v1754
        %v2230 = vpop.f32.mrb[0].mxu0
        %v2231 = vadd.f32 0.0, %v2230
        %v2232 = vpop.f32.mrb[0].mxu0
        %2233 = vmatprep.mubr.f32.mxu0 0.0
        %2234 = vmatmul.mubr.f32.gmra.mrb[0].mxu0 %v1755
        %v2235 = vpop.f32.mrb[0].mxu0
        %v2236 = vadd.f32 0.0, %v2235
        %v2237 = vpop.f32.mrb[0].mxu0
        %2238 = vmatprep.mubr.f32.mxu0 0.0
        %2239 = vmatmul.mubr.f32.gmra.mrb[0].mxu0 %v1756
        %v2240 = vpop.f32.mrb[0].mxu0
        %v2241 = vadd.f32 0.0, %v2240
        %v2242 = vpop.f32.mrb[0].mxu0
        %2243 = vmatprep.mubr.f32.mxu0 0.0
        %2244 = vmatmul.mubr.f32.gmra.mrb[0].mxu0 %v1757
        %v2245 = vpop.f32.mrb[0].mxu0
        %v2246 = vadd.f32 0.0, %v2245
        %v2247 = vpop.f32.mrb[0].mxu0
        %2248 = vmatprep.mubr.f32.mxu0 0.0
        %2249 = vmatmul.mubr.f32.gmra.mrb[0].mxu0 %v1758
        %v2250 = vpop.f32.mrb[0].mxu0
        %v2251 = vadd.f32 0.0, %v2250
        %v2252 = vpop.f32.mrb[0].mxu0
        %2253 = vmatprep.mubr.f32.mxu0 0.0
        %2254 = vmatmul.mubr.f32.gmra.mrb[0].mxu0 %v1759
        %v2255 = vpop.f32.mrb[0].mxu0
        %v2256 = vadd.f32 0.0, %v2255
        %v2257 = vpop.f32.mrb[0].mxu0
        %2258 = vmatprep.mubr.f32.mxu0 0.0
        %2259 = vmatmul.mubr.f32.gmra.mrb[0].mxu0 %v1760
        %v2260 = vpop.f32.mrb[0].mxu0
        %v2261 = vadd.f32 0.0, %v2260
        %v2262 = vpop.f32.mrb[0].mxu0
        %2263 = vmatprep.mubr.f32.mxu0 0.0
        %2264 = vmatmul.mubr.f32.gmra.mrb[0].mxu0 %v1761
        %v2265 = vpop.f32.mrb[0].mxu0
        %v2266 = vadd.f32 0.0, %v2265
        %v2267 = vpop.f32.mrb[0].mxu0
        %2268 = vmatprep.mubr.f32.mxu0 0.0
        %2269 = vmatmul.mubr.f32.gmra.mrb[0].mxu0 %v1762
        %v2270 = vpop.f32.mrb[0].mxu0
        %v2271 = vadd.f32 0.0, %v2270
        %v2272 = vpop.f32.mrb[0].mxu0
        %2273 = vmatprep.mubr.f32.mxu0 0.0
        %2274 = vmatmul.mubr.f32.gmra.mrb[0].mxu0 %v1763
        %v2275 = vpop.f32.mrb[0].mxu0
        %v2276 = vadd.f32 0.0, %v2275
        %v2277 = vpop.f32.mrb[0].mxu0
        %2278 = vdwg.mxu0
        %2279 = vmatprep.subr.mxu0 0.0
        %2280 = vmatpush1.msra.mxu0 %v608
        %2281 = vmatprep.subr.mxu0 0.0
        %2282 = vmatpush1.msra.mxu0 %v609
        %2283 = vmatprep.subr.mxu0 0.0
        %2284 = vmatpush1.msra.mxu0 %v610
        %2285 = vmatprep.subr.mxu0 0.0
        %2286 = vmatpush1.msra.mxu0 %v611
        %2287 = vmatprep.subr.mxu0 0.0
        %2288 = vmatpush1.msra.mxu0 %v612
        %2289 = vmatprep.subr.mxu0 0.0
        %2290 = vmatpush1.msra.mxu0 %v613
        %2291 = vmatprep.subr.mxu0 0.0
        %2292 = vmatpush1.msra.mxu0 %v614
        %2293 = vmatprep.subr.mxu0 0.0
        %2294 = vmatpush1.msra.mxu0 %v615
        %2295 = vmatprep.subr.mxu0 0.0
        %2296 = vmatpush1.msra.mxu0 %v616
        %2297 = vmatprep.subr.mxu0 0.0
        %2298 = vmatpush1.msra.mxu0 %v617
        %2299 = vmatprep.subr.mxu0 0.0
        %2300 = vmatpush1.msra.mxu0 %v618
        %2301 = vmatprep.subr.mxu0 0.0
        %2302 = vmatpush1.msra.mxu0 %v619
        %2303 = vmatprep.subr.mxu0 0.0
        %2304 = vmatpush1.msra.mxu0 %v620
        %2305 = vmatprep.subr.mxu0 0.0
        %2306 = vmatpush1.msra.mxu0 %v621
        %2307 = vmatprep.subr.mxu0 0.0
        %2308 = vmatpush1.msra.mxu0 %v622
        %2309 = vmatprep.subr.mxu0 0.0
        %2310 = vmatpush1.msra.mxu0 %v623
        %2311 = vmatprep.subr.mxu0 0.0
        %2312 = vmatpush1.msra.mxu0 0.0
        %2313 = vmatprep.subr.mxu0 0.0
        %2314 = vmatpush1.msra.mxu0 0.0
        %2315 = vmatprep.subr.mxu0 0.0
        %2316 = vmatpush1.msra.mxu0 0.0
        %2317 = vmatprep.subr.mxu0 0.0
        %2318 = vmatpush1.msra.mxu0 0.0
        %2319 = vmatprep.subr.mxu0 0.0
        %2320 = vmatpush1.msra.mxu0 0.0
        %2321 = vmatprep.subr.mxu0 0.0
        %2322 = vmatpush1.msra.mxu0 0.0
        %2323 = vmatprep.subr.mxu0 0.0
        %2324 = vmatpush1.msra.mxu0 0.0
        %2325 = vmatprep.subr.mxu0 0.0
        %2326 = vmatpush1.msra.mxu0 0.0
        %2327 = vmatprep.subr.mxu0 0.0
        %2328 = vmatpush1.msra.mxu0 0.0
        %2329 = vmatprep.subr.mxu0 0.0
        %2330 = vmatpush1.msra.mxu0 0.0
        %2331 = vmatprep.subr.mxu0 0.0
        %2332 = vmatpush1.msra.mxu0 0.0
        %2333 = vmatprep.subr.mxu0 0.0
        %2334 = vmatpush1.msra.mxu0 0.0
        %2335 = vmatprep.subr.mxu0 0.0
        %2336 = vmatpush1.msra.mxu0 0.0
        %2337 = vmatprep.subr.mxu0 0.0
        %2338 = vmatpush1.msra.mxu0 0.0
        %2339 = vmatprep.subr.mxu0 0.0
        %2340 = vmatpush1.msra.mxu0 0.0
        %2341 = vmatprep.subr.mxu0 0.0
        %2342 = vmatpush1.msra.mxu0 0.0
        %2343 = vmatprep.mubr.f32.mxu0 0.0
        %2344 = vmatmul.mubr.f32.gmra.mrb[0].mxu0 %v1764
        %v2345 = vpop.f32.mrb[0].mxu0
        %v2346 = vadd.f32 0.0, %v2345
        %v2347 = vpop.f32.mrb[0].mxu0
        %2348 = vmatprep.mubr.f32.mxu0 0.0
        %2349 = vmatmul.mubr.f32.gmra.mrb[0].mxu0 %v1765
        %v2350 = vpop.f32.mrb[0].mxu0
        %v2351 = vadd.f32 0.0, %v2350
        %v2352 = vpop.f32.mrb[0].mxu0
        %2353 = vmatprep.mubr.f32.mxu0 0.0
        %2354 = vmatmul.mubr.f32.gmra.mrb[0].mxu0 %v1766
        %v2355 = vpop.f32.mrb[0].mxu0
        %v2356 = vadd.f32 0.0, %v2355
        %v2357 = vpop.f32.mrb[0].mxu0
        %2358 = vmatprep.mubr.f32.mxu0 0.0
        %2359 = vmatmul.mubr.f32.gmra.mrb[0].mxu0 %v1767
        %v2360 = vpop.f32.mrb[0].mxu0
        %v2361 = vadd.f32 0.0, %v2360
        %v2362 = vpop.f32.mrb[0].mxu0
        %2363 = vmatprep.mubr.f32.mxu0 0.0
        %2364 = vmatmul.mubr.f32.gmra.mrb[0].mxu0 %v1768
        %v2365 = vpop.f32.mrb[0].mxu0
        %v2366 = vadd.f32 0.0, %v2365
        %v2367 = vpop.f32.mrb[0].mxu0
        %2368 = vmatprep.mubr.f32.mxu0 0.0
        %2369 = vmatmul.mubr.f32.gmra.mrb[0].mxu0 %v1769
        %v2370 = vpop.f32.mrb[0].mxu0
        %v2371 = vadd.f32 0.0, %v2370
        %v2372 = vpop.f32.mrb[0].mxu0
        %2373 = vmatprep.mubr.f32.mxu0 0.0
        %2374 = vmatmul.mubr.f32.gmra.mrb[0].mxu0 %v1770
        %v2375 = vpop.f32.mrb[0].mxu0
        %v2376 = vadd.f32 0.0, %v2375
        %v2377 = vpop.f32.mrb[0].mxu0
        %2378 = vmatprep.mubr.f32.mxu0 0.0
        %2379 = vmatmul.mubr.f32.gmra.mrb[0].mxu0 %v1771
        %v2380 = vpop.f32.mrb[0].mxu0
        %v2381 = vadd.f32 0.0, %v2380
        %v2382 = vpop.f32.mrb[0].mxu0
        %2383 = vmatprep.mubr.f32.mxu0 0.0
        %2384 = vmatmul.mubr.f32.gmra.mrb[0].mxu0 %v1772
        %v2385 = vpop.f32.mrb[0].mxu0
        %v2386 = vadd.f32 0.0, %v2385
        %v2387 = vpop.f32.mrb[0].mxu0
        %2388 = vmatprep.mubr.f32.mxu0 0.0
        %2389 = vmatmul.mubr.f32.gmra.mrb[0].mxu0 %v1773
        %v2390 = vpop.f32.mrb[0].mxu0
        %v2391 = vadd.f32 0.0, %v2390
        %v2392 = vpop.f32.mrb[0].mxu0
        %2393 = vmatprep.mubr.f32.mxu0 0.0
        %2394 = vmatmul.mubr.f32.gmra.mrb[0].mxu0 %v1774
        %v2395 = vpop.f32.mrb[0].mxu0
        %v2396 = vadd.f32 0.0, %v2395
        %v2397 = vpop.f32.mrb[0].mxu0
        %2398 = vmatprep.mubr.f32.mxu0 0.0
        %2399 = vmatmul.mubr.f32.gmra.mrb[0].mxu0 %v1775
        %v2400 = vpop.f32.mrb[0].mxu0
        %v2401 = vadd.f32 0.0, %v2400
        %v2402 = vpop.f32.mrb[0].mxu0
        %2403 = vmatprep.mubr.f32.mxu0 0.0
        %2404 = vmatmul.mubr.f32.gmra.mrb[0].mxu0 %v1776
        %v2405 = vpop.f32.mrb[0].mxu0
        %v2406 = vadd.f32 0.0, %v2405
        %v2407 = vpop.f32.mrb[0].mxu0
        %2408 = vmatprep.mubr.f32.mxu0 0.0
        %2409 = vmatmul.mubr.f32.gmra.mrb[0].mxu0 %v1777
        %v2410 = vpop.f32.mrb[0].mxu0
        %v2411 = vadd.f32 0.0, %v2410
        %v2412 = vpop.f32.mrb[0].mxu0
        %2413 = vmatprep.mubr.f32.mxu0 0.0
        %2414 = vmatmul.mubr.f32.gmra.mrb[0].mxu0 %v1778
        %v2415 = vpop.f32.mrb[0].mxu0
        %v2416 = vadd.f32 0.0, %v2415
        %v2417 = vpop.f32.mrb[0].mxu0
        %2418 = vmatprep.mubr.f32.mxu0 0.0
        %2419 = vmatmul.mubr.f32.gmra.mrb[0].mxu0 %v1779
        %v2420 = vpop.f32.mrb[0].mxu0
        %v2421 = vadd.f32 0.0, %v2420
        %v2422 = vpop.f32.mrb[0].mxu0
        %2423 = vdwg.mxu0
        %2424 = vst [vmem:[%s347] sm:$0xff] %v1911
        %2425 = vst [vmem:[%s347 + $0x8] sm:$0xff] %v1916
        %2426 = vst [vmem:[%s347 + $0x10] sm:$0xff] %v1921
        %2427 = vst [vmem:[%s347 + $0x18] sm:$0xff] %v1926
        %2428 = vst [vmem:[%s347 + $0x20] sm:$0xff] %v1931
        %2429 = vst [vmem:[%s347 + $0x28] sm:$0xff] %v1936
        %2430 = vst [vmem:[%s347 + $0x30] sm:$0xff] %v1941
        %2431 = vst [vmem:[%s347 + $0x38] sm:$0xff] %v1946
        %2432 = vst [vmem:[%s347 + $0x40] sm:$0xff] %v1951
        %2433 = vst [vmem:[%s347 + $0x48] sm:$0xff] %v1956
        %2434 = vst [vmem:[%s347 + $0x50] sm:$0xff] %v1961
        %2435 = vst [vmem:[%s347 + $0x58] sm:$0xff] %v1966
        %2436 = vst [vmem:[%s347 + $0x60] sm:$0xff] %v1971
        %2437 = vst [vmem:[%s347 + $0x68] sm:$0xff] %v1976
        %2438 = vst [vmem:[%s347 + $0x70] sm:$0xff] %v1981
        %2439 = vst [vmem:[%s347 + $0x78] sm:$0xff] %v1986
        %2440 = vst [vmem:[%s347 + $0x80] sm:$0xff] %v2056
        %2441 = vst [vmem:[%s347 + $0x88] sm:$0xff] %v2061
        %2442 = vst [vmem:[%s347 + $0x90] sm:$0xff] %v2066
        %2443 = vst [vmem:[%s347 + $0x98] sm:$0xff] %v2071
        %2444 = vst [vmem:[%s347 + $0xa0] sm:$0xff] %v2076
        %2445 = vst [vmem:[%s347 + $0xa8] sm:$0xff] %v2081
        %2446 = vst [vmem:[%s347 + $0xb0] sm:$0xff] %v2086
        %2447 = vst [vmem:[%s347 + $0xb8] sm:$0xff] %v2091
        %2448 = vst [vmem:[%s347 + $0xc0] sm:$0xff] %v2096
        %2449 = vst [vmem:[%s347 + $0xc8] sm:$0xff] %v2101
        %2450 = vst [vmem:[%s347 + $0xd0] sm:$0xff] %v2106
        %2451 = vst [vmem:[%s347 + $0xd8] sm:$0xff] %v2111
        %2452 = vst [vmem:[%s347 + $0xe0] sm:$0xff] %v2116
        %2453 = vst [vmem:[%s347 + $0xe8] sm:$0xff] %v2121
        %2454 = vst [vmem:[%s347 + $0xf0] sm:$0xff] %v2126
        %2455 = vst [vmem:[%s347 + $0xf8] sm:$0xff] %v2131
        %2456 = vst [vmem:[%s347 + $0x100] sm:$0xff] %v2201
        %2457 = vst [vmem:[%s347 + $0x108] sm:$0xff] %v2206
        %2458 = vst [vmem:[%s347 + $0x110] sm:$0xff] %v2211
        %2459 = vst [vmem:[%s347 + $0x118] sm:$0xff] %v2216
        %2460 = vst [vmem:[%s347 + $0x120] sm:$0xff] %v2221
        %2461 = vst [vmem:[%s347 + $0x128] sm:$0xff] %v2226
        %2462 = vst [vmem:[%s347 + $0x130] sm:$0xff] %v2231
        %2463 = vst [vmem:[%s347 + $0x138] sm:$0xff] %v2236
        %2464 = vst [vmem:[%s347 + $0x140] sm:$0xff] %v2241
        %2465 = vst [vmem:[%s347 + $0x148] sm:$0xff] %v2246
        %2466 = vst [vmem:[%s347 + $0x150] sm:$0xff] %v2251
        %2467 = vst [vmem:[%s347 + $0x158] sm:$0xff] %v2256
        %2468 = vst [vmem:[%s347 + $0x160] sm:$0xff] %v2261
        %2469 = vst [vmem:[%s347 + $0x168] sm:$0xff] %v2266
        %2470 = vst [vmem:[%s347 + $0x170] sm:$0xff] %v2271
        %2471 = vst [vmem:[%s347 + $0x178] sm:$0xff] %v2276
        %2472 = vst [vmem:[%s347 + $0x180] sm:$0xff] %v2346
        %2473 = vst [vmem:[%s347 + $0x188] sm:$0xff] %v2351
        %2474 = vst [vmem:[%s347 + $0x190] sm:$0xff] %v2356
        %2475 = vst [vmem:[%s347 + $0x198] sm:$0xff] %v2361
        %2476 = vst [vmem:[%s347 + $0x1a0] sm:$0xff] %v2366
        %2477 = vst [vmem:[%s347 + $0x1a8] sm:$0xff] %v2371
        %2478 = vst [vmem:[%s347 + $0x1b0] sm:$0xff] %v2376
        %2479 = vst [vmem:[%s347 + $0x1b8] sm:$0xff] %v2381
        %2480 = vst [vmem:[%s347 + $0x1c0] sm:$0xff] %v2386
        %2481 = vst [vmem:[%s347 + $0x1c8] sm:$0xff] %v2391
        %2482 = vst [vmem:[%s347 + $0x1d0] sm:$0xff] %v2396
        %2483 = vst [vmem:[%s347 + $0x1d8] sm:$0xff] %v2401
        %2484 = vst [vmem:[%s347 + $0x1e0] sm:$0xff] %v2406
        %2485 = vst [vmem:[%s347 + $0x1e8] sm:$0xff] %v2411
        %2486 = vst [vmem:[%s347 + $0x1f0] sm:$0xff] %v2416
        %2487 = vst [vmem:[%s347 + $0x1f8] sm:$0xff] %v2421
        %s2488 = sand.u32 %s153, 1
        %s2489 = scalar_lea.sflag [#allocation5], %s2488
        %s2490 = sand.u32 %s153, 1
        %s2491 = smul.addr %s2490, 512
        %s2492 = scalar_lea.vmem [#allocation9], %s2491
        %s2493 = sand.u32 %s181, 1
        %s2494 = scalar_lea.sflag [#allocation11], %s2493
        %s2495 = sand.u32 %s181, 1
        %s2496 = smul.addr %s2495, 512
        %s2497 = scalar_lea.vmem [#allocation10], %s2496
        // Predicated region
        $region49: #{tpu_custom_call.1} parent=35 // pred_check
          %p2498 = pneg %p163
        $region50: #{tpu_custom_call.1} parent=35 // pred_check_branch
          %2500 = sbr.rel (%p2498) target = $region52
        $region51: #{tpu_custom_call.1} parent=35 // pred_region
          %s2501 = smul.u32 4, %s34
          %s2502 = smul.u32 16, %s35
          %s2504 = ssub.s32 8192, 8192
          %2505 = vsyncadd %s2489, %s2504
          %s2506 = smul.addr %s2501, 16
          %s2507 = sadd.s32 %s2502, %s2506
          %s2508 = smul.addr %s2507, 128
          %s2509 = scalar_lea.hbm %s4, %s2508
          %s2510 = sshll.u32 %s2492, 4
          %s2511 = int_to_ptr.vmem [resolvable:$true] %s2510
          %2516 = dma.vmem_to_hbm [thread:$0]  %s2511, 8192, %s2509, %s2489, 128, 128, 8
        $region52: #{tpu_custom_call.1} parent=35 // pred_fallthru
          _
        // Predicated region
        $region53: #{tpu_custom_call.1} parent=35 // pred_check
          %p2517 = pneg %p191
        $region54: #{tpu_custom_call.1} parent=35 // pred_check_branch
          %2519 = sbr.rel (%p2517) target = $region56
        $region55: #{tpu_custom_call.1} parent=35 // pred_region
          %s2520 = smul.u32 4, %s34
          %s2521 = smul.u32 16, %s35
          %s2523 = ssub.s32 8192, 8192
          %2524 = vsyncadd %s2494, %s2523
          %s2525 = smul.addr %s2520, 16
          %s2526 = sadd.s32 %s2521, %s2525
          %s2527 = smul.addr %s2526, 128
          %s2528 = scalar_lea.hbm %s5, %s2527
          %s2529 = sshll.u32 %s2497, 4
          %s2530 = int_to_ptr.vmem [resolvable:$true] %s2529
          %2535 = dma.vmem_to_hbm [thread:$0]  %s2530, 8192, %s2528, %s2494, 128, 128, 8
        $region56: #{tpu_custom_call.1} parent=35 // pred_fallthru
          _
      $region36: #{tpu_custom_call.1} parent=5 // pred_fallthru
        _
      %p2536 = scmp.le.s32.totalorder 2, %s25
      // Predicated region
      $region57: #{tpu_custom_call.1} parent=5 // pred_check
        %p2537 = pneg %p2536
      $region58: #{tpu_custom_call.1} parent=5 // pred_check_branch
        %2539 = sbr.rel (%p2537) target = $region60
      $region59: #{tpu_custom_call.1} parent=5 // pred_region
        %s2540 = ssub.s32 %s25, 2
        // Predicated region
        $region61: #{tpu_custom_call.1} parent=59 // pred_check
          %p2541 = pneg %p169
        $region62: #{tpu_custom_call.1} parent=59 // pred_check_branch
          %2543 = sbr.rel (%p2541) target = $region64
        $region63: #{tpu_custom_call.1} parent=59 // pred_region
          %s2544 = sand.u32 %s154, 1
          %s2545 = scalar_lea.sflag [#allocation5], %s2544
          %s2546 = sand.u32 %s154, 1
          %s2547 = smul.addr %s2546, 512
          %s2548 = scalar_lea.vmem [#allocation9], %s2547
          %2549 = dma.done %s2545, 8192
        $region64: #{tpu_custom_call.1} parent=59 // pred_fallthru
          _
        // Predicated region
        $region65: #{tpu_custom_call.1} parent=59 // pred_check
          %p2550 = pneg %p197
        $region66: #{tpu_custom_call.1} parent=59 // pred_check_branch
          %2552 = sbr.rel (%p2550) target = $region68
        $region67: #{tpu_custom_call.1} parent=59 // pred_region
          %s2553 = sand.u32 %s182, 1
          %s2554 = scalar_lea.sflag [#allocation11], %s2553
          %s2555 = sand.u32 %s182, 1
          %s2556 = smul.addr %s2555, 512
          %s2557 = scalar_lea.vmem [#allocation10], %s2556
          %2558 = dma.done %s2554, 8192
        $region68: #{tpu_custom_call.1} parent=59 // pred_fallthru
          _
      $region60: #{tpu_custom_call.1} parent=5 // pred_fallthru
        _
    $region6: #{tpu_custom_call.1} parent=1 // loop_footer
      %s29 = sadd.s32 1, %s25
    $region7: #{tpu_custom_call.1} parent=1 // loop_footer_branch
      %24 = sbr.rel target = $region3
    $region8: #{tpu_custom_call.1} parent=1 // loop_exit
      _
    %2559 = vsyncpa [#allocation4], 1
    %s2560 = scalar_lea.sflag [#allocation4], 1
    %2561 = vsyncpa %s2560, 1
    %2562 = vsyncpa [#allocation7], 1
    %s2563 = scalar_lea.sflag [#allocation7], 1
    %2564 = vsyncpa %s2563, 1
    %2565 = vsyncpa [#allocation5], 1
    %s2566 = scalar_lea.sflag [#allocation5], 1
    %2567 = vsyncpa %s2566, 1
    %2568 = vsyncpa [#allocation11], 1
    %s2569 = scalar_lea.sflag [#allocation11], 1
    %2570 = vsyncpa %s2569, 1

</llo_original>
